<compile_context>
chip_gen: v5e
topology: v5e:2x2
jax: 0.10.0
libtpu: 0.0.40
codegen_flags: <defaults>
</compile_context>

<pallas_src>
import numpy as np
import jax
import jax.numpy as jnp
from jax import lax
from jax.experimental import pallas as pl
from jax.experimental.pallas import tpu as pltpu

DIL = 4   # dilation rate of SpatialAttention


def _make_bam_kernel(H, W, B_blk):
    HW = H * W
    # tap order matches the fused weight layout: t = ky*3 + kx
    OFFS = [((ky - 1) * DIL, (kx - 1) * DIL) for ky in range(3) for kx in range(3)]

    def kernel(x_ref, w1_ref, w2_ref, wr_ref, wd1_ref, wd2_ref, wf_ref,
               bmid_ref, bc_ref, out_ref, col_ref):
        mid = w1_ref.shape[0]

        # ----- packed biases (fewer tiny DMA descriptors) -----
        b1 = bmid_ref[:, 0:1]
        br = bmid_ref[:, 1:2]
        bd1 = bmid_ref[:, 2:3]
        bd2 = bmid_ref[:, 3:4]
        b2 = bc_ref[:, 0:1]
        bf = bc_ref[:, 1:2]

        # im2col slab: zero once per grid step; per-conv stores fully overwrite
        # the valid lane ranges, the remaining (halo) lanes stay zero.
        col_ref[...] = jnp.zeros(col_ref.shape, jnp.float32)

        # per-tap validity masks over the flattened spatial axis (hoisted:
        # shared by both dilated convs and all images in this block).
        kf = lax.broadcasted_iota(jnp.int32, (1, HW), 1).astype(jnp.float32)
        i_f = jnp.floor((kf + 0.5) * (1.0 / W))        # row index
        j_f = kf - i_f * W                              # col index
        masks = []
        for dy, dx in OFFS:
            ok = ((i_f + dy >= 0) & (i_f + dy <= H - 1) &
                  (j_f + dx >= 0) & (j_f + dx <= W - 1))
            masks.append(jnp.where(ok, 1.0, 0.0))

        def dilated(yb, wd, bd):
            # yb: (mid, HW); wd: (mid, 9*mid); bd: (mid, 1)
            for t, (dy, dx) in enumerate(OFFS):
                s = dy * W + dx                         # flat shift
                lo, hi = max(0, -s), HW - max(0, s)     # valid destination range
                col_ref[t * mid:(t + 1) * mid, lo:hi] = (
                    yb[:, lo + s:hi + s] * masks[t][:, lo:hi])
            z = jnp.dot(wd, col_ref[...], preferred_element_type=jnp.float32)
            return jnp.maximum(z + bd, 0.0)

        for bi in range(B_blk):                         # static unroll over block
            xb = x_ref[bi]                              # (C, HW), lane-dense

            # ---------- ChannelAttention: GAP + 2-layer MLP ----------
            avg = jnp.mean(xb, axis=1, keepdims=True)                              # (C,1)
            h1 = jnp.maximum(
                jnp.dot(w1_ref[...], avg, preferred_element_type=jnp.float32) + b1, 0.0)
            ca = jnp.dot(w2_ref[...], h1, preferred_element_type=jnp.float32) + b2  # (C,1)

            # ---------- SpatialAttention ----------
            y = jnp.maximum(
                jnp.dot(wr_ref[...], xb, preferred_element_type=jnp.float32) + br, 0.0)  # (mid,HW)
            y = dilated(y, wd1_ref[...], bd1)
            y = dilated(y, wd2_ref[...], bd2)
            sa = jnp.dot(wf_ref[...], y, preferred_element_type=jnp.float32) + bf   # (C,HW)

            # ---------- BAM combine (matches the given module) ----------
            att = 1.0 + jax.nn.sigmoid(ca * sa)
            out_ref[bi] = att * xb

    return kernel


def bam_pallas(x_nchw, params):
    B, C, H, W = x_nchw.shape
    HW = H * W
    mid = params['w1'].shape[0]
    x = x_nchw.reshape(B, C, HW).astype(jnp.float32)     # free reshape, lane-dense

    # at most 2 grid steps: minimal per-step overhead (v5e/v6e) while exposing
    # batch parallelism to v7x's two TensorCores.
    bb = max(1, -(-B // 2))
    if B % bb != 0:
        bb = 1
    nsteps = B // bb

    kernel = _make_bam_kernel(H, W, bb)

    weight_args = (params['w1'], params['w2'], params['wr'],
                   params['wd1'], params['wd2'], params['wf'],
                   params['b_mid'], params['b_c'])

    def xmap(g):
        return (g, 0, 0)

    def wmap(g):
        return (0, 0)

    out = pl.pallas_call(
        kernel,
        out_shape=jax.ShapeDtypeStruct((B, C, HW), jnp.float32),
        grid=(nsteps,),
        in_specs=[pl.BlockSpec((bb, C, HW), xmap)] +
                 [pl.BlockSpec(a.shape, wmap) for a in weight_args],
        out_specs=pl.BlockSpec((bb, C, HW), xmap),
        scratch_shapes=[pltpu.VMEM((9 * mid, HW), jnp.float32)],
        compiler_params=pltpu.CompilerParams(dimension_semantics=("parallel",)),
    )(x, *weight_args)
    return out.reshape(B, C, H, W)


# ---------------- parameter setup (deterministic) ----------------
def _fold_bn(w_oihw, b, gamma, beta, mean, var, eps=1e-5):
    s = gamma / jnp.sqrt(var + eps)
    return w_oihw * s[:, None, None, None], (b - mean) * s + beta


def init_params(key, C, reduction=16):
    mid = C // reduction
    assert mid >= 1
    ks = list(jax.random.split(key, 32))

    def rnd(shape, scale=0.2):
        return scale * jax.random.normal(ks.pop(0), shape, dtype=jnp.float32)

    # ChannelAttention MLP (PyTorch Linear layout: (out, in))
    w1, b1 = rnd((mid, C)), rnd((mid,))
    w2, b2 = rnd((C, mid)), rnd((C,))

    # SpatialAttention: reduce 1x1 conv + BN (eval-mode fold)
    wr, br0 = rnd((mid, C, 1, 1)), rnd((mid,))
    wr_f, br = _fold_bn(wr, br0, 1.0 + rnd((mid,), 0.1), rnd((mid,), 0.1),
                        rnd((mid,), 0.1), 1.0 + 0.1 * jax.random.uniform(ks.pop(0), (mid,)))

    # two dilated 3x3 convs + BN, stored as fused-tap weights (mid, 9*mid)
    # with w_fused[o, (ky*3+kx)*mid + i] = W[o, i, ky, kx]
    def dil_block():
        w, b0 = rnd((mid, mid, 3, 3)), rnd((mid,))
        w_f, b = _fold_bn(w, b0, 1.0 + rnd((mid,), 0.1), rnd((mid,), 0.1),
                          rnd((mid,), 0.1), 1.0 + 0.1 * jax.random.uniform(ks.pop(0), (mid,)))
        w_fused = jnp.transpose(w_f, (0, 2, 3, 1)).reshape(mid, 9 * mid)
        return w_fused, b

    wd1, bd1 = dil_block()
    wd2, bd2 = dil_block()

    # final 1x1 conv (no BN)
    wf, bf = rnd((C, mid, 1, 1)), rnd((C,))

    return {
        'w1': w1, 'w2': w2,
        'wr': wr_f[:, :, 0, 0],
        'wd1': wd1, 'wd2': wd2,
        'wf': wf[:, :, 0, 0],
        'b_mid': jnp.stack([b1, br, bd1, bd2], axis=1),   # (mid, 4)
        'b_c': jnp.stack([b2, bf], axis=1),               # (C, 2)
    }


# ---------------- pure-JAX reference (same folded params) ----------------
def bam_ref(x, p):                                        # x: (B, C, H, W)
    B, C, H, W = x.shape
    mid = p['w1'].shape[0]
    b1, br, bd1, bd2 = (p['b_mid'][:, i] for i in range(4))
    b2, bf = p['b_c'][:, 0], p['b_c'][:, 1]

    avg = x.mean(axis=(2, 3))                             # (B, C)
    h1 = jnp.maximum(avg @ p['w1'].T + b1, 0.0)
    ca = h1 @ p['w2'].T + b2                              # (B, C)

    y = jnp.maximum(jnp.einsum('mc,bchw->bmhw', p['wr'], x)
                    + br[None, :, None, None], 0.0)

    def dil(z, wfused, b):
        w = wfused.reshape(mid, 3, 3, mid)                # (o, ky, kx, i)
        w_hwio = jnp.transpose(w, (1, 2, 3, 0))           # (ky, kx, i, o)
        o = lax.conv_general_dilated(z, w_hwio, (1, 1),
                                     padding=((DIL, DIL), (DIL, DIL)),
                                     rhs_dilation=(DIL, DIL),
                                     dimension_numbers=('NCHW', 'HWIO', 'NCHW'))
        return jnp.maximum(o + b[None, :, None, None], 0.0)

    y = dil(y, p['wd1'], bd1)
    y = dil(y, p['wd2'], bd2)
    sa = jnp.einsum('cm,bmhw->bchw', p['wf'], y) + bf[None, :, None, None]

    att = 1.0 + jax.nn.sigmoid(ca[:, :, None, None] * sa)
    return att * x


if __name__ == "__main__":
    key = jax.random.PRNGKey(0)
    kx, kp = jax.random.split(key)

    B, C, H, W = 2, 32, 16, 16                  # channels must be >= reduction=16
    x = jax.random.normal(kx, (B, C, H, W), dtype=jnp.float32)
    params = init_params(kp, C)

    out = jax.block_until_ready(bam_pallas(x, params))
    ref = jax.block_until_ready(bam_ref(x, params))
    np.testing.assert_allclose(np.asarray(out), np.asarray(ref), rtol=2e-3, atol=2e-3)

    print("KERNEL_OK")
</pallas_src>

<mosaic_0001>
module attributes {stable_mosaic.version = 11 : i64} {
  func.func @kernel(%arg0: i32, %arg1: memref<1x32x256xf32, #tpu.memory_space<vmem>>, %arg2: memref<2x32xf32, #tpu.memory_space<vmem>>, %arg3: memref<32x2xf32, #tpu.memory_space<vmem>>, %arg4: memref<2x32xf32, #tpu.memory_space<vmem>>, %arg5: memref<2x18xf32, #tpu.memory_space<vmem>>, %arg6: memref<2x18xf32, #tpu.memory_space<vmem>>, %arg7: memref<32x2xf32, #tpu.memory_space<vmem>>, %arg8: memref<2x4xf32, #tpu.memory_space<vmem>>, %arg9: memref<32x2xf32, #tpu.memory_space<vmem>>, %arg10: memref<1x32x256xf32, #tpu.memory_space<vmem>>, %arg11: memref<18x256xf32, #tpu.memory_space<vmem>>) attributes {dimension_semantics = [#tpu.dimension_semantics<parallel>], iteration_bounds = array<i64: 2>, scalar_prefetch = 0 : i64, scratch_operands = 1 : i64, tpu.core_type = #tpu.core_type<tc>, window_params = [{transform_indices = @transform_0, window_bounds = array<i64: 1, 32, 256>}, {pipeline_mode = #tpu.pipeline_mode<synchronous>, transform_indices = @transform_1, window_bounds = array<i64: 2, 32>}, {pipeline_mode = #tpu.pipeline_mode<synchronous>, transform_indices = @transform_2, window_bounds = array<i64: 32, 2>}, {pipeline_mode = #tpu.pipeline_mode<synchronous>, transform_indices = @transform_3, window_bounds = array<i64: 2, 32>}, {pipeline_mode = #tpu.pipeline_mode<synchronous>, transform_indices = @transform_4, window_bounds = array<i64: 2, 18>}, {pipeline_mode = #tpu.pipeline_mode<synchronous>, transform_indices = @transform_5, window_bounds = array<i64: 2, 18>}, {pipeline_mode = #tpu.pipeline_mode<synchronous>, transform_indices = @transform_6, window_bounds = array<i64: 32, 2>}, {pipeline_mode = #tpu.pipeline_mode<synchronous>, transform_indices = @transform_7, window_bounds = array<i64: 2, 4>}, {pipeline_mode = #tpu.pipeline_mode<synchronous>, transform_indices = @transform_8, window_bounds = array<i64: 32, 2>}, {transform_indices = @transform_9, window_bounds = array<i64: 1, 32, 256>}]} {
    %c0 = arith.constant 0 : index
    %c0_0 = arith.constant 0 : index
    %0 = vector.load %arg8[%c0, %c0_0] : memref<2x4xf32, #tpu.memory_space<vmem>>, vector<2x1xf32>
    %c0_1 = arith.constant 0 : index
    %c1 = arith.constant 1 : index
    %1 = vector.load %arg8[%c0_1, %c1] : memref<2x4xf32, #tpu.memory_space<vmem>>, vector<2x1xf32>
    %c0_2 = arith.constant 0 : index
    %c2 = arith.constant 2 : index
    %2 = vector.load %arg8[%c0_2, %c2] : memref<2x4xf32, #tpu.memory_space<vmem>>, vector<2x1xf32>
    %c0_3 = arith.constant 0 : index
    %c3 = arith.constant 3 : index
    %3 = vector.load %arg8[%c0_3, %c3] : memref<2x4xf32, #tpu.memory_space<vmem>>, vector<2x1xf32>
    %c0_4 = arith.constant 0 : index
    %c0_5 = arith.constant 0 : index
    %4 = vector.load %arg9[%c0_4, %c0_5] : memref<32x2xf32, #tpu.memory_space<vmem>>, vector<32x1xf32>
    %c0_6 = arith.constant 0 : index
    %c1_7 = arith.constant 1 : index
    %5 = vector.load %arg9[%c0_6, %c1_7] : memref<32x2xf32, #tpu.memory_space<vmem>>, vector<32x1xf32>
    %cst = arith.constant 0.000000e+00 : f32
    %6 = vector.broadcast %cst : f32 to vector<18x256xf32>
    %c0_8 = arith.constant 0 : index
    %c0_9 = arith.constant 0 : index
    %7 = vector.load %arg11[%c0_8, %c0_9] : memref<18x256xf32, #tpu.memory_space<vmem>>, vector<18x256xf32>
    tpu.vector_store %arg11[%c0_8, %c0_9], %6 {strides = array<i32>} : memref<18x256xf32, #tpu.memory_space<vmem>>, vector<18x256xf32>,
    %8 = tpu.iota {dimensions = array<i32: 1>} : vector<1x256xi32>
    %9 = arith.sitofp %8 : vector<1x256xi32> to vector<1x256xf32>
    %cst_10 = arith.constant 5.000000e-01 : f32
    %10 = vector.broadcast %cst_10 : f32 to vector<1x256xf32>
    %11 = arith.addf %9, %10 : vector<1x256xf32>
    %cst_11 = arith.constant 6.250000e-02 : f32
    %12 = vector.broadcast %cst_11 : f32 to vector<1x256xf32>
    %13 = arith.mulf %11, %12 : vector<1x256xf32>
    %14 = math.floor %13 : vector<1x256xf32>
    %cst_12 = arith.constant 1.600000e+01 : f32
    %15 = vector.broadcast %cst_12 : f32 to vector<1x256xf32>
    %16 = arith.mulf %14, %15 : vector<1x256xf32>
    %17 = arith.subf %9, %16 : vector<1x256xf32>
    %cst_13 = arith.constant -4.000000e+00 : f32
    %18 = vector.broadcast %cst_13 : f32 to vector<1x256xf32>
    %19 = arith.addf %14, %18 : vector<1x256xf32>
    %cst_14 = arith.constant 0.000000e+00 : f32
    %20 = vector.broadcast %cst_14 : f32 to vector<1x256xf32>
    %21 = arith.cmpf oge, %19, %20 : vector<1x256xf32>
    %cst_15 = arith.constant -4.000000e+00 : f32
    %22 = vector.broadcast %cst_15 : f32 to vector<1x256xf32>
    %23 = arith.addf %14, %22 : vector<1x256xf32>
    %cst_16 = arith.constant 1.500000e+01 : f32
    %24 = vector.broadcast %cst_16 : f32 to vector<1x256xf32>
    %25 = arith.cmpf ole, %23, %24 : vector<1x256xf32>
    %26 = arith.andi %21, %25 : vector<1x256xi1>
    %cst_17 = arith.constant -4.000000e+00 : f32
    %27 = vector.broadcast %cst_17 : f32 to vector<1x256xf32>
    %28 = arith.addf %17, %27 : vector<1x256xf32>
    %cst_18 = arith.constant 0.000000e+00 : f32
    %29 = vector.broadcast %cst_18 : f32 to vector<1x256xf32>
    %30 = arith.cmpf oge, %28, %29 : vector<1x256xf32>
    %31 = arith.andi %26, %30 : vector<1x256xi1>
    %cst_19 = arith.constant -4.000000e+00 : f32
    %32 = vector.broadcast %cst_19 : f32 to vector<1x256xf32>
    %33 = arith.addf %17, %32 : vector<1x256xf32>
    %cst_20 = arith.constant 1.500000e+01 : f32
    %34 = vector.broadcast %cst_20 : f32 to vector<1x256xf32>
    %35 = arith.cmpf ole, %33, %34 : vector<1x256xf32>
    %36 = arith.andi %31, %35 : vector<1x256xi1>
    %cst_21 = arith.constant 1.000000e+00 : f32
    %cst_22 = arith.constant 0.000000e+00 : f32
    %37 = vector.broadcast %cst_21 : f32 to vector<1x256xf32>
    %38 = vector.broadcast %cst_22 : f32 to vector<1x256xf32>
    %39 = arith.select %36, %37, %38 : vector<1x256xi1>, vector<1x256xf32>
    %cst_23 = arith.constant -4.000000e+00 : f32
    %40 = vector.broadcast %cst_23 : f32 to vector<1x256xf32>
    %41 = arith.addf %14, %40 : vector<1x256xf32>
    %cst_24 = arith.constant 0.000000e+00 : f32
    %42 = vector.broadcast %cst_24 : f32 to vector<1x256xf32>
    %43 = arith.cmpf oge, %41, %42 : vector<1x256xf32>
    %cst_25 = arith.constant -4.000000e+00 : f32
    %44 = vector.broadcast %cst_25 : f32 to vector<1x256xf32>
    %45 = arith.addf %14, %44 : vector<1x256xf32>
    %cst_26 = arith.constant 1.500000e+01 : f32
    %46 = vector.broadcast %cst_26 : f32 to vector<1x256xf32>
    %47 = arith.cmpf ole, %45, %46 : vector<1x256xf32>
    %48 = arith.andi %43, %47 : vector<1x256xi1>
    %cst_27 = arith.constant 0.000000e+00 : f32
    %49 = vector.broadcast %cst_27 : f32 to vector<1x256xf32>
    %50 = arith.addf %17, %49 : vector<1x256xf32>
    %cst_28 = arith.constant 0.000000e+00 : f32
    %51 = vector.broadcast %cst_28 : f32 to vector<1x256xf32>
    %52 = arith.cmpf oge, %50, %51 : vector<1x256xf32>
    %53 = arith.andi %48, %52 : vector<1x256xi1>
    %cst_29 = arith.constant 0.000000e+00 : f32
    %54 = vector.broadcast %cst_29 : f32 to vector<1x256xf32>
    %55 = arith.addf %17, %54 : vector<1x256xf32>
    %cst_30 = arith.constant 1.500000e+01 : f32
    %56 = vector.broadcast %cst_30 : f32 to vector<1x256xf32>
    %57 = arith.cmpf ole, %55, %56 : vector<1x256xf32>
    %58 = arith.andi %53, %57 : vector<1x256xi1>
    %cst_31 = arith.constant 1.000000e+00 : f32
    %cst_32 = arith.constant 0.000000e+00 : f32
    %59 = vector.broadcast %cst_31 : f32 to vector<1x256xf32>
    %60 = vector.broadcast %cst_32 : f32 to vector<1x256xf32>
    %61 = arith.select %58, %59, %60 : vector<1x256xi1>, vector<1x256xf32>
    %cst_33 = arith.constant -4.000000e+00 : f32
    %62 = vector.broadcast %cst_33 : f32 to vector<1x256xf32>
    %63 = arith.addf %14, %62 : vector<1x256xf32>
    %cst_34 = arith.constant 0.000000e+00 : f32
    %64 = vector.broadcast %cst_34 : f32 to vector<1x256xf32>
    %65 = arith.cmpf oge, %63, %64 : vector<1x256xf32>
    %cst_35 = arith.constant -4.000000e+00 : f32
    %66 = vector.broadcast %cst_35 : f32 to vector<1x256xf32>
    %67 = arith.addf %14, %66 : vector<1x256xf32>
    %cst_36 = arith.constant 1.500000e+01 : f32
    %68 = vector.broadcast %cst_36 : f32 to vector<1x256xf32>
    %69 = arith.cmpf ole, %67, %68 : vector<1x256xf32>
    %70 = arith.andi %65, %69 : vector<1x256xi1>
    %cst_37 = arith.constant 4.000000e+00 : f32
    %71 = vector.broadcast %cst_37 : f32 to vector<1x256xf32>
    %72 = arith.addf %17, %71 : vector<1x256xf32>
    %cst_38 = arith.constant 0.000000e+00 : f32
    %73 = vector.broadcast %cst_38 : f32 to vector<1x256xf32>
    %74 = arith.cmpf oge, %72, %73 : vector<1x256xf32>
    %75 = arith.andi %70, %74 : vector<1x256xi1>
    %cst_39 = arith.constant 4.000000e+00 : f32
    %76 = vector.broadcast %cst_39 : f32 to vector<1x256xf32>
    %77 = arith.addf %17, %76 : vector<1x256xf32>
    %cst_40 = arith.constant 1.500000e+01 : f32
    %78 = vector.broadcast %cst_40 : f32 to vector<1x256xf32>
    %79 = arith.cmpf ole, %77, %78 : vector<1x256xf32>
    %80 = arith.andi %75, %79 : vector<1x256xi1>
    %cst_41 = arith.constant 1.000000e+00 : f32
    %cst_42 = arith.constant 0.000000e+00 : f32
    %81 = vector.broadcast %cst_41 : f32 to vector<1x256xf32>
    %82 = vector.broadcast %cst_42 : f32 to vector<1x256xf32>
    %83 = arith.select %80, %81, %82 : vector<1x256xi1>, vector<1x256xf32>
    %cst_43 = arith.constant 0.000000e+00 : f32
    %84 = vector.broadcast %cst_43 : f32 to vector<1x256xf32>
    %85 = arith.addf %14, %84 : vector<1x256xf32>
    %cst_44 = arith.constant 0.000000e+00 : f32
    %86 = vector.broadcast %cst_44 : f32 to vector<1x256xf32>
    %87 = arith.cmpf oge, %85, %86 : vector<1x256xf32>
    %cst_45 = arith.constant 0.000000e+00 : f32
    %88 = vector.broadcast %cst_45 : f32 to vector<1x256xf32>
    %89 = arith.addf %14, %88 : vector<1x256xf32>
    %cst_46 = arith.constant 1.500000e+01 : f32
    %90 = vector.broadcast %cst_46 : f32 to vector<1x256xf32>
    %91 = arith.cmpf ole, %89, %90 : vector<1x256xf32>
    %92 = arith.andi %87, %91 : vector<1x256xi1>
    %cst_47 = arith.constant -4.000000e+00 : f32
    %93 = vector.broadcast %cst_47 : f32 to vector<1x256xf32>
    %94 = arith.addf %17, %93 : vector<1x256xf32>
    %cst_48 = arith.constant 0.000000e+00 : f32
    %95 = vector.broadcast %cst_48 : f32 to vector<1x256xf32>
    %96 = arith.cmpf oge, %94, %95 : vector<1x256xf32>
    %97 = arith.andi %92, %96 : vector<1x256xi1>
    %cst_49 = arith.constant -4.000000e+00 : f32
    %98 = vector.broadcast %cst_49 : f32 to vector<1x256xf32>
    %99 = arith.addf %17, %98 : vector<1x256xf32>
    %cst_50 = arith.constant 1.500000e+01 : f32
    %100 = vector.broadcast %cst_50 : f32 to vector<1x256xf32>
    %101 = arith.cmpf ole, %99, %100 : vector<1x256xf32>
    %102 = arith.andi %97, %101 : vector<1x256xi1>
    %cst_51 = arith.constant 1.000000e+00 : f32
    %cst_52 = arith.constant 0.000000e+00 : f32
    %103 = vector.broadcast %cst_51 : f32 to vector<1x256xf32>
    %104 = vector.broadcast %cst_52 : f32 to vector<1x256xf32>
    %105 = arith.select %102, %103, %104 : vector<1x256xi1>, vector<1x256xf32>
    %cst_53 = arith.constant 0.000000e+00 : f32
    %106 = vector.broadcast %cst_53 : f32 to vector<1x256xf32>
    %107 = arith.addf %14, %106 : vector<1x256xf32>
    %cst_54 = arith.constant 0.000000e+00 : f32
    %108 = vector.broadcast %cst_54 : f32 to vector<1x256xf32>
    %109 = arith.cmpf oge, %107, %108 : vector<1x256xf32>
    %cst_55 = arith.constant 0.000000e+00 : f32
    %110 = vector.broadcast %cst_55 : f32 to vector<1x256xf32>
    %111 = arith.addf %14, %110 : vector<1x256xf32>
    %cst_56 = arith.constant 1.500000e+01 : f32
    %112 = vector.broadcast %cst_56 : f32 to vector<1x256xf32>
    %113 = arith.cmpf ole, %111, %112 : vector<1x256xf32>
    %114 = arith.andi %109, %113 : vector<1x256xi1>
    %cst_57 = arith.constant 0.000000e+00 : f32
    %115 = vector.broadcast %cst_57 : f32 to vector<1x256xf32>
    %116 = arith.addf %17, %115 : vector<1x256xf32>
    %cst_58 = arith.constant 0.000000e+00 : f32
    %117 = vector.broadcast %cst_58 : f32 to vector<1x256xf32>
    %118 = arith.cmpf oge, %116, %117 : vector<1x256xf32>
    %119 = arith.andi %114, %118 : vector<1x256xi1>
    %cst_59 = arith.constant 0.000000e+00 : f32
    %120 = vector.broadcast %cst_59 : f32 to vector<1x256xf32>
    %121 = arith.addf %17, %120 : vector<1x256xf32>
    %cst_60 = arith.constant 1.500000e+01 : f32
    %122 = vector.broadcast %cst_60 : f32 to vector<1x256xf32>
    %123 = arith.cmpf ole, %121, %122 : vector<1x256xf32>
    %124 = arith.andi %119, %123 : vector<1x256xi1>
    %cst_61 = arith.constant 1.000000e+00 : f32
    %cst_62 = arith.constant 0.000000e+00 : f32
    %125 = vector.broadcast %cst_61 : f32 to vector<1x256xf32>
    %126 = vector.broadcast %cst_62 : f32 to vector<1x256xf32>
    %127 = arith.select %124, %125, %126 : vector<1x256xi1>, vector<1x256xf32>
    %cst_63 = arith.constant 0.000000e+00 : f32
    %128 = vector.broadcast %cst_63 : f32 to vector<1x256xf32>
    %129 = arith.addf %14, %128 : vector<1x256xf32>
    %cst_64 = arith.constant 0.000000e+00 : f32
    %130 = vector.broadcast %cst_64 : f32 to vector<1x256xf32>
    %131 = arith.cmpf oge, %129, %130 : vector<1x256xf32>
    %cst_65 = arith.constant 0.000000e+00 : f32
    %132 = vector.broadcast %cst_65 : f32 to vector<1x256xf32>
    %133 = arith.addf %14, %132 : vector<1x256xf32>
    %cst_66 = arith.constant 1.500000e+01 : f32
    %134 = vector.broadcast %cst_66 : f32 to vector<1x256xf32>
    %135 = arith.cmpf ole, %133, %134 : vector<1x256xf32>
    %136 = arith.andi %131, %135 : vector<1x256xi1>
    %cst_67 = arith.constant 4.000000e+00 : f32
    %137 = vector.broadcast %cst_67 : f32 to vector<1x256xf32>
    %138 = arith.addf %17, %137 : vector<1x256xf32>
    %cst_68 = arith.constant 0.000000e+00 : f32
    %139 = vector.broadcast %cst_68 : f32 to vector<1x256xf32>
    %140 = arith.cmpf oge, %138, %139 : vector<1x256xf32>
    %141 = arith.andi %136, %140 : vector<1x256xi1>
    %cst_69 = arith.constant 4.000000e+00 : f32
    %142 = vector.broadcast %cst_69 : f32 to vector<1x256xf32>
    %143 = arith.addf %17, %142 : vector<1x256xf32>
    %cst_70 = arith.constant 1.500000e+01 : f32
    %144 = vector.broadcast %cst_70 : f32 to vector<1x256xf32>
    %145 = arith.cmpf ole, %143, %144 : vector<1x256xf32>
    %146 = arith.andi %141, %145 : vector<1x256xi1>
    %cst_71 = arith.constant 1.000000e+00 : f32
    %cst_72 = arith.constant 0.000000e+00 : f32
    %147 = vector.broadcast %cst_71 : f32 to vector<1x256xf32>
    %148 = vector.broadcast %cst_72 : f32 to vector<1x256xf32>
    %149 = arith.select %146, %147, %148 : vector<1x256xi1>, vector<1x256xf32>
    %cst_73 = arith.constant 4.000000e+00 : f32
    %150 = vector.broadcast %cst_73 : f32 to vector<1x256xf32>
    %151 = arith.addf %14, %150 : vector<1x256xf32>
    %cst_74 = arith.constant 0.000000e+00 : f32
    %152 = vector.broadcast %cst_74 : f32 to vector<1x256xf32>
    %153 = arith.cmpf oge, %151, %152 : vector<1x256xf32>
    %cst_75 = arith.constant 4.000000e+00 : f32
    %154 = vector.broadcast %cst_75 : f32 to vector<1x256xf32>
    %155 = arith.addf %14, %154 : vector<1x256xf32>
    %cst_76 = arith.constant 1.500000e+01 : f32
    %156 = vector.broadcast %cst_76 : f32 to vector<1x256xf32>
    %157 = arith.cmpf ole, %155, %156 : vector<1x256xf32>
    %158 = arith.andi %153, %157 : vector<1x256xi1>
    %cst_77 = arith.constant -4.000000e+00 : f32
    %159 = vector.broadcast %cst_77 : f32 to vector<1x256xf32>
    %160 = arith.addf %17, %159 : vector<1x256xf32>
    %cst_78 = arith.constant 0.000000e+00 : f32
    %161 = vector.broadcast %cst_78 : f32 to vector<1x256xf32>
    %162 = arith.cmpf oge, %160, %161 : vector<1x256xf32>
    %163 = arith.andi %158, %162 : vector<1x256xi1>
    %cst_79 = arith.constant -4.000000e+00 : f32
    %164 = vector.broadcast %cst_79 : f32 to vector<1x256xf32>
    %165 = arith.addf %17, %164 : vector<1x256xf32>
    %cst_80 = arith.constant 1.500000e+01 : f32
    %166 = vector.broadcast %cst_80 : f32 to vector<1x256xf32>
    %167 = arith.cmpf ole, %165, %166 : vector<1x256xf32>
    %168 = arith.andi %163, %167 : vector<1x256xi1>
    %cst_81 = arith.constant 1.000000e+00 : f32
    %cst_82 = arith.constant 0.000000e+00 : f32
    %169 = vector.broadcast %cst_81 : f32 to vector<1x256xf32>
    %170 = vector.broadcast %cst_82 : f32 to vector<1x256xf32>
    %171 = arith.select %168, %169, %170 : vector<1x256xi1>, vector<1x256xf32>
    %cst_83 = arith.constant 4.000000e+00 : f32
    %172 = vector.broadcast %cst_83 : f32 to vector<1x256xf32>
    %173 = arith.addf %14, %172 : vector<1x256xf32>
    %cst_84 = arith.constant 0.000000e+00 : f32
    %174 = vector.broadcast %cst_84 : f32 to vector<1x256xf32>
    %175 = arith.cmpf oge, %173, %174 : vector<1x256xf32>
    %cst_85 = arith.constant 4.000000e+00 : f32
    %176 = vector.broadcast %cst_85 : f32 to vector<1x256xf32>
    %177 = arith.addf %14, %176 : vector<1x256xf32>
    %cst_86 = arith.constant 1.500000e+01 : f32
    %178 = vector.broadcast %cst_86 : f32 to vector<1x256xf32>
    %179 = arith.cmpf ole, %177, %178 : vector<1x256xf32>
    %180 = arith.andi %175, %179 : vector<1x256xi1>
    %cst_87 = arith.constant 0.000000e+00 : f32
    %181 = vector.broadcast %cst_87 : f32 to vector<1x256xf32>
    %182 = arith.addf %17, %181 : vector<1x256xf32>
    %cst_88 = arith.constant 0.000000e+00 : f32
    %183 = vector.broadcast %cst_88 : f32 to vector<1x256xf32>
    %184 = arith.cmpf oge, %182, %183 : vector<1x256xf32>
    %185 = arith.andi %180, %184 : vector<1x256xi1>
    %cst_89 = arith.constant 0.000000e+00 : f32
    %186 = vector.broadcast %cst_89 : f32 to vector<1x256xf32>
    %187 = arith.addf %17, %186 : vector<1x256xf32>
    %cst_90 = arith.constant 1.500000e+01 : f32
    %188 = vector.broadcast %cst_90 : f32 to vector<1x256xf32>
    %189 = arith.cmpf ole, %187, %188 : vector<1x256xf32>
    %190 = arith.andi %185, %189 : vector<1x256xi1>
    %cst_91 = arith.constant 1.000000e+00 : f32
    %cst_92 = arith.constant 0.000000e+00 : f32
    %191 = vector.broadcast %cst_91 : f32 to vector<1x256xf32>
    %192 = vector.broadcast %cst_92 : f32 to vector<1x256xf32>
    %193 = arith.select %190, %191, %192 : vector<1x256xi1>, vector<1x256xf32>
    %cst_93 = arith.constant 4.000000e+00 : f32
    %194 = vector.broadcast %cst_93 : f32 to vector<1x256xf32>
    %195 = arith.addf %14, %194 : vector<1x256xf32>
    %cst_94 = arith.constant 0.000000e+00 : f32
    %196 = vector.broadcast %cst_94 : f32 to vector<1x256xf32>
    %197 = arith.cmpf oge, %195, %196 : vector<1x256xf32>
    %cst_95 = arith.constant 4.000000e+00 : f32
    %198 = vector.broadcast %cst_95 : f32 to vector<1x256xf32>
    %199 = arith.addf %14, %198 : vector<1x256xf32>
    %cst_96 = arith.constant 1.500000e+01 : f32
    %200 = vector.broadcast %cst_96 : f32 to vector<1x256xf32>
    %201 = arith.cmpf ole, %199, %200 : vector<1x256xf32>
    %202 = arith.andi %197, %201 : vector<1x256xi1>
    %cst_97 = arith.constant 4.000000e+00 : f32
    %203 = vector.broadcast %cst_97 : f32 to vector<1x256xf32>
    %204 = arith.addf %17, %203 : vector<1x256xf32>
    %cst_98 = arith.constant 0.000000e+00 : f32
    %205 = vector.broadcast %cst_98 : f32 to vector<1x256xf32>
    %206 = arith.cmpf oge, %204, %205 : vector<1x256xf32>
    %207 = arith.andi %202, %206 : vector<1x256xi1>
    %cst_99 = arith.constant 4.000000e+00 : f32
    %208 = vector.broadcast %cst_99 : f32 to vector<1x256xf32>
    %209 = arith.addf %17, %208 : vector<1x256xf32>
    %cst_100 = arith.constant 1.500000e+01 : f32
    %210 = vector.broadcast %cst_100 : f32 to vector<1x256xf32>
    %211 = arith.cmpf ole, %209, %210 : vector<1x256xf32>
    %212 = arith.andi %207, %211 : vector<1x256xi1>
    %cst_101 = arith.constant 1.000000e+00 : f32
    %cst_102 = arith.constant 0.000000e+00 : f32
    %213 = vector.broadcast %cst_101 : f32 to vector<1x256xf32>
    %214 = vector.broadcast %cst_102 : f32 to vector<1x256xf32>
    %215 = arith.select %212, %213, %214 : vector<1x256xi1>, vector<1x256xf32>
    %c0_103 = arith.constant 0 : index
    %c0_104 = arith.constant 0 : index
    %c0_105 = arith.constant 0 : index
    %216 = vector.load %arg1[%c0_103, %c0_104, %c0_105] : memref<1x32x256xf32, #tpu.memory_space<vmem>>, vector<1x32x256xf32>
    %217 = vector.shape_cast %216 : vector<1x32x256xf32> to vector<32x256xf32>
    %cst_106 = arith.constant dense<0.000000e+00> : vector<32xf32>
    %218 = vector.multi_reduction <add>, %217, %cst_106 [1] : vector<32x256xf32> to vector<32xf32>
    %219 = vector.shape_cast %218 : vector<32xf32> to vector<32x1xf32>
    %cst_107 = arith.constant 2.560000e+02 : f32
    %220 = vector.broadcast %cst_107 : f32 to vector<32x1xf32>
    %221 = arith.divf %219, %220 : vector<32x1xf32>
    %c0_108 = arith.constant 0 : index
    %c0_109 = arith.constant 0 : index
    %222 = vector.load %arg2[%c0_108, %c0_109] : memref<2x32xf32, #tpu.memory_space<vmem>>, vector<2x32xf32>
    %cst_110 = arith.constant dense<0.000000e+00> : vector<2x1xf32>
    %223 = tpu.matmul %222, %221, %cst_110 {dimension_numbers = #tpu.dot_dimension_numbers<[1], [0], [0], [1], [0, 0, 1, 1], [], []>} : vector<2x32xf32>, vector<32x1xf32>, vector<2x1xf32> -> vector<2x1xf32>
    %224 = arith.addf %223, %0 : vector<2x1xf32>
    %cst_111 = arith.constant 0.000000e+00 : f32
    %225 = vector.broadcast %cst_111 : f32 to vector<2x1xf32>
    %226 = arith.maximumf %224, %225 : vector<2x1xf32>
    %c0_112 = arith.constant 0 : index
    %c0_113 = arith.constant 0 : index
    %227 = vector.load %arg3[%c0_112, %c0_113] : memref<32x2xf32, #tpu.memory_space<vmem>>, vector<32x2xf32>
    %cst_114 = arith.constant dense<0.000000e+00> : vector<32x1xf32>
    %228 = tpu.matmul %227, %226, %cst_114 {dimension_numbers = #tpu.dot_dimension_numbers<[1], [0], [0], [1], [0, 0, 1, 1], [], []>} : vector<32x2xf32>, vector<2x1xf32>, vector<32x1xf32> -> vector<32x1xf32>
    %229 = arith.addf %228, %4 : vector<32x1xf32>
    %c0_115 = arith.constant 0 : index
    %c0_116 = arith.constant 0 : index
    %230 = vector.load %arg4[%c0_115, %c0_116] : memref<2x32xf32, #tpu.memory_space<vmem>>, vector<2x32xf32>
    %cst_117 = arith.constant dense<0.000000e+00> : vector<2x256xf32>
    %231 = tpu.matmul %230, %217, %cst_117 {dimension_numbers = #tpu.dot_dimension_numbers<[1], [0], [0], [1], [0, 0, 1, 1], [], []>} : vector<2x32xf32>, vector<32x256xf32>, vector<2x256xf32> -> vector<2x256xf32>
    %232 = vector.broadcast %1 : vector<2x1xf32> to vector<2x256xf32>
    %233 = arith.addf %231, %232 : vector<2x256xf32>
    %cst_118 = arith.constant 0.000000e+00 : f32
    %234 = vector.broadcast %cst_118 : f32 to vector<2x256xf32>
    %235 = arith.maximumf %233, %234 : vector<2x256xf32>
    %c0_119 = arith.constant 0 : index
    %c0_120 = arith.constant 0 : index
    %236 = vector.load %arg5[%c0_119, %c0_120] : memref<2x18xf32, #tpu.memory_space<vmem>>, vector<2x18xf32>
    %237 = vector.extract_strided_slice %235 {offsets = [0, 0], sizes = [2, 188], strides = [1, 1]} : vector<2x256xf32> to vector<2x188xf32>
    %238 = vector.extract_strided_slice %39 {offsets = [0, 68], sizes = [1, 188], strides = [1, 1]} : vector<1x256xf32> to vector<1x188xf32>
    %239 = vector.broadcast %238 : vector<1x188xf32> to vector<2x188xf32>
    %240 = arith.mulf %237, %239 : vector<2x188xf32>
    %c0_121 = arith.constant 0 : index
    %c68 = arith.constant 68 : index
    %241 = vector.load %arg11[%c0_121, %c68] : memref<18x256xf32, #tpu.memory_space<vmem>>, vector<2x188xf32>
    tpu.vector_store %arg11[%c0_121, %c68], %240 {strides = array<i32>} : memref<18x256xf32, #tpu.memory_space<vmem>>, vector<2x188xf32>,
    %242 = vector.extract_strided_slice %235 {offsets = [0, 0], sizes = [2, 192], strides = [1, 1]} : vector<2x256xf32> to vector<2x192xf32>
    %243 = vector.extract_strided_slice %61 {offsets = [0, 64], sizes = [1, 192], strides = [1, 1]} : vector<1x256xf32> to vector<1x192xf32>
    %244 = vector.broadcast %243 : vector<1x192xf32> to vector<2x192xf32>
    %245 = arith.mulf %242, %244 : vector<2x192xf32>
    %c2_122 = arith.constant 2 : index
    %c64 = arith.constant 64 : index
    %246 = vector.load %arg11[%c2_122, %c64] : memref<18x256xf32, #tpu.memory_space<vmem>>, vector<2x192xf32>
    tpu.vector_store %arg11[%c2_122, %c64], %245 {strides = array<i32>} : memref<18x256xf32, #tpu.memory_space<vmem>>, vector<2x192xf32>,
    %247 = vector.extract_strided_slice %235 {offsets = [0, 0], sizes = [2, 196], strides = [1, 1]} : vector<2x256xf32> to vector<2x196xf32>
    %248 = vector.extract_strided_slice %83 {offsets = [0, 60], sizes = [1, 196], strides = [1, 1]} : vector<1x256xf32> to vector<1x196xf32>
    %249 = vector.broadcast %248 : vector<1x196xf32> to vector<2x196xf32>
    %250 = arith.mulf %247, %249 : vector<2x196xf32>
    %c4 = arith.constant 4 : index
    %c60 = arith.constant 60 : index
    %251 = vector.load %arg11[%c4, %c60] : memref<18x256xf32, #tpu.memory_space<vmem>>, vector<2x196xf32>
    tpu.vector_store %arg11[%c4, %c60], %250 {strides = array<i32>} : memref<18x256xf32, #tpu.memory_space<vmem>>, vector<2x196xf32>,
    %252 = vector.extract_strided_slice %235 {offsets = [0, 0], sizes = [2, 252], strides = [1, 1]} : vector<2x256xf32> to vector<2x252xf32>
    %253 = vector.extract_strided_slice %105 {offsets = [0, 4], sizes = [1, 252], strides = [1, 1]} : vector<1x256xf32> to vector<1x252xf32>
    %254 = vector.broadcast %253 : vector<1x252xf32> to vector<2x252xf32>
    %255 = arith.mulf %252, %254 : vector<2x252xf32>
    %c6 = arith.constant 6 : index
    %c4_123 = arith.constant 4 : index
    %256 = vector.load %arg11[%c6, %c4_123] : memref<18x256xf32, #tpu.memory_space<vmem>>, vector<2x252xf32>
    tpu.vector_store %arg11[%c6, %c4_123], %255 {strides = array<i32>} : memref<18x256xf32, #tpu.memory_space<vmem>>, vector<2x252xf32>,
    %257 = vector.broadcast %127 : vector<1x256xf32> to vector<2x256xf32>
    %258 = arith.mulf %235, %257 : vector<2x256xf32>
    %c8 = arith.constant 8 : index
    %c0_124 = arith.constant 0 : index
    %259 = vector.load %arg11[%c8, %c0_124] : memref<18x256xf32, #tpu.memory_space<vmem>>, vector<2x256xf32>
    tpu.vector_store %arg11[%c8, %c0_124], %258 {strides = array<i32>} : memref<18x256xf32, #tpu.memory_space<vmem>>, vector<2x256xf32>,
    %260 = vector.extract_strided_slice %235 {offsets = [0, 4], sizes = [2, 252], strides = [1, 1]} : vector<2x256xf32> to vector<2x252xf32>
    %261 = vector.extract_strided_slice %149 {offsets = [0, 0], sizes = [1, 252], strides = [1, 1]} : vector<1x256xf32> to vector<1x252xf32>
    %262 = vector.broadcast %261 : vector<1x252xf32> to vector<2x252xf32>
    %263 = arith.mulf %260, %262 : vector<2x252xf32>
    %c10 = arith.constant 10 : index
    %c0_125 = arith.constant 0 : index
    %264 = vector.load %arg11[%c10, %c0_125] : memref<18x256xf32, #tpu.memory_space<vmem>>, vector<2x252xf32>
    tpu.vector_store %arg11[%c10, %c0_125], %263 {strides = array<i32>} : memref<18x256xf32, #tpu.memory_space<vmem>>, vector<2x252xf32>,
    %265 = vector.extract_strided_slice %235 {offsets = [0, 60], sizes = [2, 196], strides = [1, 1]} : vector<2x256xf32> to vector<2x196xf32>
    %266 = vector.extract_strided_slice %171 {offsets = [0, 0], sizes = [1, 196], strides = [1, 1]} : vector<1x256xf32> to vector<1x196xf32>
    %267 = vector.broadcast %266 : vector<1x196xf32> to vector<2x196xf32>
    %268 = arith.mulf %265, %267 : vector<2x196xf32>
    %c12 = arith.constant 12 : index
    %c0_126 = arith.constant 0 : index
    %269 = vector.load %arg11[%c12, %c0_126] : memref<18x256xf32, #tpu.memory_space<vmem>>, vector<2x196xf32>
    tpu.vector_store %arg11[%c12, %c0_126], %268 {strides = array<i32>} : memref<18x256xf32, #tpu.memory_space<vmem>>, vector<2x196xf32>,
    %270 = vector.extract_strided_slice %235 {offsets = [0, 64], sizes = [2, 192], strides = [1, 1]} : vector<2x256xf32> to vector<2x192xf32>
    %271 = vector.extract_strided_slice %193 {offsets = [0, 0], sizes = [1, 192], strides = [1, 1]} : vector<1x256xf32> to vector<1x192xf32>
    %272 = vector.broadcast %271 : vector<1x192xf32> to vector<2x192xf32>
    %273 = arith.mulf %270, %272 : vector<2x192xf32>
    %c14 = arith.constant 14 : index
    %c0_127 = arith.constant 0 : index
    %274 = vector.load %arg11[%c14, %c0_127] : memref<18x256xf32, #tpu.memory_space<vmem>>, vector<2x192xf32>
    tpu.vector_store %arg11[%c14, %c0_127], %273 {strides = array<i32>} : memref<18x256xf32, #tpu.memory_space<vmem>>, vector<2x192xf32>,
    %275 = vector.extract_strided_slice %235 {offsets = [0, 68], sizes = [2, 188], strides = [1, 1]} : vector<2x256xf32> to vector<2x188xf32>
    %276 = vector.extract_strided_slice %215 {offsets = [0, 0], sizes = [1, 188], strides = [1, 1]} : vector<1x256xf32> to vector<1x188xf32>
    %277 = vector.broadcast %276 : vector<1x188xf32> to vector<2x188xf32>
    %278 = arith.mulf %275, %277 : vector<2x188xf32>
    %c16 = arith.constant 16 : index
    %c0_128 = arith.constant 0 : index
    %279 = vector.load %arg11[%c16, %c0_128] : memref<18x256xf32, #tpu.memory_space<vmem>>, vector<2x188xf32>
    tpu.vector_store %arg11[%c16, %c0_128], %278 {strides = array<i32>} : memref<18x256xf32, #tpu.memory_space<vmem>>, vector<2x188xf32>,
    %c0_129 = arith.constant 0 : index
    %c0_130 = arith.constant 0 : index
    %280 = vector.load %arg11[%c0_129, %c0_130] : memref<18x256xf32, #tpu.memory_space<vmem>>, vector<18x256xf32>
    %cst_131 = arith.constant dense<0.000000e+00> : vector<2x256xf32>
    %281 = tpu.matmul %236, %280, %cst_131 {dimension_numbers = #tpu.dot_dimension_numbers<[1], [0], [0], [1], [0, 0, 1, 1], [], []>} : vector<2x18xf32>, vector<18x256xf32>, vector<2x256xf32> -> vector<2x256xf32>
    %282 = vector.broadcast %2 : vector<2x1xf32> to vector<2x256xf32>
    %283 = arith.addf %281, %282 : vector<2x256xf32>
    %cst_132 = arith.constant 0.000000e+00 : f32
    %284 = vector.broadcast %cst_132 : f32 to vector<2x256xf32>
    %285 = arith.maximumf %283, %284 : vector<2x256xf32>
    %c0_133 = arith.constant 0 : index
    %c0_134 = arith.constant 0 : index
    %286 = vector.load %arg6[%c0_133, %c0_134] : memref<2x18xf32, #tpu.memory_space<vmem>>, vector<2x18xf32>
    %287 = vector.extract_strided_slice %285 {offsets = [0, 0], sizes = [2, 188], strides = [1, 1]} : vector<2x256xf32> to vector<2x188xf32>
    %288 = vector.extract_strided_slice %39 {offsets = [0, 68], sizes = [1, 188], strides = [1, 1]} : vector<1x256xf32> to vector<1x188xf32>
    %289 = vector.broadcast %288 : vector<1x188xf32> to vector<2x188xf32>
    %290 = arith.mulf %287, %289 : vector<2x188xf32>
    %c0_135 = arith.constant 0 : index
    %c68_136 = arith.constant 68 : index
    %291 = vector.load %arg11[%c0_135, %c68_136] : memref<18x256xf32, #tpu.memory_space<vmem>>, vector<2x188xf32>
    tpu.vector_store %arg11[%c0_135, %c68_136], %290 {strides = array<i32>} : memref<18x256xf32, #tpu.memory_space<vmem>>, vector<2x188xf32>,
    %292 = vector.extract_strided_slice %285 {offsets = [0, 0], sizes = [2, 192], strides = [1, 1]} : vector<2x256xf32> to vector<2x192xf32>
    %293 = vector.extract_strided_slice %61 {offsets = [0, 64], sizes = [1, 192], strides = [1, 1]} : vector<1x256xf32> to vector<1x192xf32>
    %294 = vector.broadcast %293 : vector<1x192xf32> to vector<2x192xf32>
    %295 = arith.mulf %292, %294 : vector<2x192xf32>
    %c2_137 = arith.constant 2 : index
    %c64_138 = arith.constant 64 : index
    %296 = vector.load %arg11[%c2_137, %c64_138] : memref<18x256xf32, #tpu.memory_space<vmem>>, vector<2x192xf32>
    tpu.vector_store %arg11[%c2_137, %c64_138], %295 {strides = array<i32>} : memref<18x256xf32, #tpu.memory_space<vmem>>, vector<2x192xf32>,
    %297 = vector.extract_strided_slice %285 {offsets = [0, 0], sizes = [2, 196], strides = [1, 1]} : vector<2x256xf32> to vector<2x196xf32>
    %298 = vector.extract_strided_slice %83 {offsets = [0, 60], sizes = [1, 196], strides = [1, 1]} : vector<1x256xf32> to vector<1x196xf32>
    %299 = vector.broadcast %298 : vector<1x196xf32> to vector<2x196xf32>
    %300 = arith.mulf %297, %299 : vector<2x196xf32>
    %c4_139 = arith.constant 4 : index
    %c60_140 = arith.constant 60 : index
    %301 = vector.load %arg11[%c4_139, %c60_140] : memref<18x256xf32, #tpu.memory_space<vmem>>, vector<2x196xf32>
    tpu.vector_store %arg11[%c4_139, %c60_140], %300 {strides = array<i32>} : memref<18x256xf32, #tpu.memory_space<vmem>>, vector<2x196xf32>,
    %302 = vector.extract_strided_slice %285 {offsets = [0, 0], sizes = [2, 252], strides = [1, 1]} : vector<2x256xf32> to vector<2x252xf32>
    %303 = vector.extract_strided_slice %105 {offsets = [0, 4], sizes = [1, 252], strides = [1, 1]} : vector<1x256xf32> to vector<1x252xf32>
    %304 = vector.broadcast %303 : vector<1x252xf32> to vector<2x252xf32>
    %305 = arith.mulf %302, %304 : vector<2x252xf32>
    %c6_141 = arith.constant 6 : index
    %c4_142 = arith.constant 4 : index
    %306 = vector.load %arg11[%c6_141, %c4_142] : memref<18x256xf32, #tpu.memory_space<vmem>>, vector<2x252xf32>
    tpu.vector_store %arg11[%c6_141, %c4_142], %305 {strides = array<i32>} : memref<18x256xf32, #tpu.memory_space<vmem>>, vector<2x252xf32>,
    %307 = vector.broadcast %127 : vector<1x256xf32> to vector<2x256xf32>
    %308 = arith.mulf %285, %307 : vector<2x256xf32>
    %c8_143 = arith.constant 8 : index
    %c0_144 = arith.constant 0 : index
    %309 = vector.load %arg11[%c8_143, %c0_144] : memref<18x256xf32, #tpu.memory_space<vmem>>, vector<2x256xf32>
    tpu.vector_store %arg11[%c8_143, %c0_144], %308 {strides = array<i32>} : memref<18x256xf32, #tpu.memory_space<vmem>>, vector<2x256xf32>,
    %310 = vector.extract_strided_slice %285 {offsets = [0, 4], sizes = [2, 252], strides = [1, 1]} : vector<2x256xf32> to vector<2x252xf32>
    %311 = vector.extract_strided_slice %149 {offsets = [0, 0], sizes = [1, 252], strides = [1, 1]} : vector<1x256xf32> to vector<1x252xf32>
    %312 = vector.broadcast %311 : vector<1x252xf32> to vector<2x252xf32>
    %313 = arith.mulf %310, %312 : vector<2x252xf32>
    %c10_145 = arith.constant 10 : index
    %c0_146 = arith.constant 0 : index
    %314 = vector.load %arg11[%c10_145, %c0_146] : memref<18x256xf32, #tpu.memory_space<vmem>>, vector<2x252xf32>
    tpu.vector_store %arg11[%c10_145, %c0_146], %313 {strides = array<i32>} : memref<18x256xf32, #tpu.memory_space<vmem>>, vector<2x252xf32>,
    %315 = vector.extract_strided_slice %285 {offsets = [0, 60], sizes = [2, 196], strides = [1, 1]} : vector<2x256xf32> to vector<2x196xf32>
    %316 = vector.extract_strided_slice %171 {offsets = [0, 0], sizes = [1, 196], strides = [1, 1]} : vector<1x256xf32> to vector<1x196xf32>
    %317 = vector.broadcast %316 : vector<1x196xf32> to vector<2x196xf32>
    %318 = arith.mulf %315, %317 : vector<2x196xf32>
    %c12_147 = arith.constant 12 : index
    %c0_148 = arith.constant 0 : index
    %319 = vector.load %arg11[%c12_147, %c0_148] : memref<18x256xf32, #tpu.memory_space<vmem>>, vector<2x196xf32>
    tpu.vector_store %arg11[%c12_147, %c0_148], %318 {strides = array<i32>} : memref<18x256xf32, #tpu.memory_space<vmem>>, vector<2x196xf32>,
    %320 = vector.extract_strided_slice %285 {offsets = [0, 64], sizes = [2, 192], strides = [1, 1]} : vector<2x256xf32> to vector<2x192xf32>
    %321 = vector.extract_strided_slice %193 {offsets = [0, 0], sizes = [1, 192], strides = [1, 1]} : vector<1x256xf32> to vector<1x192xf32>
    %322 = vector.broadcast %321 : vector<1x192xf32> to vector<2x192xf32>
    %323 = arith.mulf %320, %322 : vector<2x192xf32>
    %c14_149 = arith.constant 14 : index
    %c0_150 = arith.constant 0 : index
    %324 = vector.load %arg11[%c14_149, %c0_150] : memref<18x256xf32, #tpu.memory_space<vmem>>, vector<2x192xf32>
    tpu.vector_store %arg11[%c14_149, %c0_150], %323 {strides = array<i32>} : memref<18x256xf32, #tpu.memory_space<vmem>>, vector<2x192xf32>,
    %325 = vector.extract_strided_slice %285 {offsets = [0, 68], sizes = [2, 188], strides = [1, 1]} : vector<2x256xf32> to vector<2x188xf32>
    %326 = vector.extract_strided_slice %215 {offsets = [0, 0], sizes = [1, 188], strides = [1, 1]} : vector<1x256xf32> to vector<1x188xf32>
    %327 = vector.broadcast %326 : vector<1x188xf32> to vector<2x188xf32>
    %328 = arith.mulf %325, %327 : vector<2x188xf32>
    %c16_151 = arith.constant 16 : index
    %c0_152 = arith.constant 0 : index
    %329 = vector.load %arg11[%c16_151, %c0_152] : memref<18x256xf32, #tpu.memory_space<vmem>>, vector<2x188xf32>
    tpu.vector_store %arg11[%c16_151, %c0_152], %328 {strides = array<i32>} : memref<18x256xf32, #tpu.memory_space<vmem>>, vector<2x188xf32>,
    %c0_153 = arith.constant 0 : index
    %c0_154 = arith.constant 0 : index
    %330 = vector.load %arg11[%c0_153, %c0_154] : memref<18x256xf32, #tpu.memory_space<vmem>>, vector<18x256xf32>
    %cst_155 = arith.constant dense<0.000000e+00> : vector<2x256xf32>
    %331 = tpu.matmul %286, %330, %cst_155 {dimension_numbers = #tpu.dot_dimension_numbers<[1], [0], [0], [1], [0, 0, 1, 1], [], []>} : vector<2x18xf32>, vector<18x256xf32>, vector<2x256xf32> -> vector<2x256xf32>
    %332 = vector.broadcast %3 : vector<2x1xf32> to vector<2x256xf32>
    %333 = arith.addf %331, %332 : vector<2x256xf32>
    %cst_156 = arith.constant 0.000000e+00 : f32
    %334 = vector.broadcast %cst_156 : f32 to vector<2x256xf32>
    %335 = arith.maximumf %333, %334 : vector<2x256xf32>
    %c0_157 = arith.constant 0 : index
    %c0_158 = arith.constant 0 : index
    %336 = vector.load %arg7[%c0_157, %c0_158] : memref<32x2xf32, #tpu.memory_space<vmem>>, vector<32x2xf32>
    %cst_159 = arith.constant dense<0.000000e+00> : vector<32x256xf32>
    %337 = tpu.matmul %336, %335, %cst_159 {dimension_numbers = #tpu.dot_dimension_numbers<[1], [0], [0], [1], [0, 0, 1, 1], [], []>} : vector<32x2xf32>, vector<2x256xf32>, vector<32x256xf32> -> vector<32x256xf32>
    %338 = vector.broadcast %5 : vector<32x1xf32> to vector<32x256xf32>
    %339 = arith.addf %337, %338 : vector<32x256xf32>
    %340 = vector.broadcast %229 : vector<32x1xf32> to vector<32x256xf32>
    %341 = arith.mulf %340, %339 : vector<32x256xf32>
    %342 = arith.negf %341 : vector<32x256xf32>
    %343 = math.exp %342 : vector<32x256xf32>
    %cst_160 = arith.constant 1.000000e+00 : f32
    %344 = vector.broadcast %cst_160 : f32 to vector<32x256xf32>
    %345 = arith.addf %344, %343 : vector<32x256xf32>
    %346 = arith.divf %344, %345 : vector<32x256xf32>
    %cst_161 = arith.constant 1.000000e+00 : f32
    %347 = vector.broadcast %cst_161 : f32 to vector<32x256xf32>
    %348 = arith.addf %347, %346 : vector<32x256xf32>
    %349 = arith.mulf %348, %217 : vector<32x256xf32>
    %c0_162 = arith.constant 0 : index
    %c0_163 = arith.constant 0 : index
    %c0_164 = arith.constant 0 : index
    %350 = vector.load %arg10[%c0_162, %c0_163, %c0_164] : memref<1x32x256xf32, #tpu.memory_space<vmem>>, vector<1x32x256xf32>
    %351 = vector.shape_cast %350 : vector<1x32x256xf32> to vector<32x256xf32>
    %352 = vector.shape_cast %349 : vector<32x256xf32> to vector<1x32x256xf32>
    tpu.vector_store %arg10[%c0_162, %c0_163, %c0_164], %352 {strides = array<i32>} : memref<1x32x256xf32, #tpu.memory_space<vmem>>, vector<1x32x256xf32>,
    return
  }
  func.func @transform_0(%arg0: i32) -> (i32, i32, i32) {
    %c0_i32 = arith.constant 0 : i32
    %c0_i32_0 = arith.constant 0 : i32
    %c0_i32_1 = arith.constant 0 : i32
    return %arg0, %c0_i32, %c0_i32_0 : i32, i32, i32
  }
  func.func @transform_1(%arg0: i32) -> (i32, i32) {
    %c0_i32 = arith.constant 0 : i32
    %c0_i32_0 = arith.constant 0 : i32
    %c0_i32_1 = arith.constant 0 : i32
    return %c0_i32, %c0_i32_0 : i32, i32
  }
  func.func @transform_2(%arg0: i32) -> (i32, i32) {
    %c0_i32 = arith.constant 0 : i32
    %c0_i32_0 = arith.constant 0 : i32
    %c0_i32_1 = arith.constant 0 : i32
    return %c0_i32, %c0_i32_0 : i32, i32
  }
  func.func @transform_3(%arg0: i32) -> (i32, i32) {
    %c0_i32 = arith.constant 0 : i32
    %c0_i32_0 = arith.constant 0 : i32
    %c0_i32_1 = arith.constant 0 : i32
    return %c0_i32, %c0_i32_0 : i32, i32
  }
  func.func @transform_4(%arg0: i32) -> (i32, i32) {
    %c0_i32 = arith.constant 0 : i32
    %c0_i32_0 = arith.constant 0 : i32
    %c0_i32_1 = arith.constant 0 : i32
    return %c0_i32, %c0_i32_0 : i32, i32
  }
  func.func @transform_5(%arg0: i32) -> (i32, i32) {
    %c0_i32 = arith.constant 0 : i32
    %c0_i32_0 = arith.constant 0 : i32
    %c0_i32_1 = arith.constant 0 : i32
    return %c0_i32, %c0_i32_0 : i32, i32
  }
  func.func @transform_6(%arg0: i32) -> (i32, i32) {
    %c0_i32 = arith.constant 0 : i32
    %c0_i32_0 = arith.constant 0 : i32
    %c0_i32_1 = arith.constant 0 : i32
    return %c0_i32, %c0_i32_0 : i32, i32
  }
  func.func @transform_7(%arg0: i32) -> (i32, i32) {
    %c0_i32 = arith.constant 0 : i32
    %c0_i32_0 = arith.constant 0 : i32
    %c0_i32_1 = arith.constant 0 : i32
    return %c0_i32, %c0_i32_0 : i32, i32
  }
  func.func @transform_8(%arg0: i32) -> (i32, i32) {
    %c0_i32 = arith.constant 0 : i32
    %c0_i32_0 = arith.constant 0 : i32
    %c0_i32_1 = arith.constant 0 : i32
    return %c0_i32, %c0_i32_0 : i32, i32
  }
  func.func @transform_9(%arg0: i32) -> (i32, i32, i32) {
    %c0_i32 = arith.constant 0 : i32
    %c0_i32_0 = arith.constant 0 : i32
    %c0_i32_1 = arith.constant 0 : i32
    return %arg0, %c0_i32, %c0_i32_0 : i32, i32, i32
  }
}

</mosaic_0001>

<llo_original>
// kernel: tpu_custom_call.1
$region0: #{tpu_custom_call.1}
  #allocation0 [shape = 'u32[]', space=smem, size = 0x4, offset = 0x4, fixed_abs, tag = 'smem constant byte address 0x4 - core index']
  #allocation1 [shape = 'u32[72,128]{1,0:T(1,128)}', space=vmem, size = 0x9000, scoped, tag = 'internal scratch']
  #allocation2 [shape = 'f32[18,256]{1,0:T(8,128)}', space=vmem, size = 0x6000, scoped, tag = 'scratch operand']
  %s0 = inlined_call_operand.hbm [shape: f32[2,32,256], index: 0, kind: input, shape index: {}]
  %s1 = inlined_call_operand.vmem [shape: f32[2,32], index: 1, kind: input, shape index: {}]
  %s2 = inlined_call_operand.vmem [shape: f32[32,2], index: 2, kind: input, shape index: {}]
  %s3 = inlined_call_operand.vmem [shape: f32[2,32], index: 3, kind: input, shape index: {}]
  %s4 = inlined_call_operand.vmem [shape: f32[2,18], index: 4, kind: input, shape index: {}]
  %s5 = inlined_call_operand.vmem [shape: f32[2,18], index: 5, kind: input, shape index: {}]
  %s6 = inlined_call_operand.vmem [shape: f32[32,2], index: 6, kind: input, shape index: {}]
  %s7 = inlined_call_operand.vmem [shape: f32[2,4], index: 7, kind: input, shape index: {}]
  %s8 = inlined_call_operand.vmem [shape: f32[32,2], index: 8, kind: input, shape index: {}]
  %s9 = inlined_call_operand.hbm [shape: f32[2,32,256], index: 9, kind: output, shape index: {}]
  %s10 = sld [smem:[#allocation0]]
  $region73: #{tpu_custom_call.1} parent=0
    _
  %s12 = ssub.s32 1, %s10
  %s13 = scalar_select 0, %s12, %s10
  $region1: #{tpu_custom_call.1} parent=0
    #allocation3 [shape = 'u8[65536]{0}', space=vmem, size = 0x10000, scoped, tag = 'input window, operand 0']
    #allocation4 [shape = 's32[2]{0}', space=sflag, size = 0x8, scoped, tag = 'scoped memory for tpu_custom_call.1']
    #allocation5 [shape = 's32[2]{0}', space=sflag, size = 0x8, scoped, tag = 'scoped memory for tpu_custom_call.1']
    #allocation6 [shape = 'u8[65536]{0}', space=vmem, size = 0x10000, scoped, tag = 'output window, operand 0']
    %14 = vsyncpa [#allocation4], 0
    %s15 = scalar_lea.sflag [#allocation4], 1
    %16 = vsyncpa %s15, 0
    %17 = vsyncpa [#allocation5], 0
    %s18 = scalar_lea.sflag [#allocation5], 1
    %19 = vsyncpa %s18, 0
    loop: start=0, step=1, limit=4
    $region2: #{tpu_custom_call.1} parent=1 // loop_pre_header
      _
    $region3: #{tpu_custom_call.1} parent=1 // loop_header
      %s21 = sphi 0, %s25
      %p22 = scmp.ge.s32.totalorder %s21, 4
      %s31 = sphi 0, %s33
      %s34 = sphi 0, %s31
      %s35 = sphi 0, %s34
      %s51 = sphi 0, %s35
      %s55 = sphi 0, %s55
      %s57 = sphi 0, %s55
      %s58 = sphi 0, %s57
      %s72 = sphi 0, %s58
      %s76 = sphi 0, %s76
      %s78 = sphi 0, %s76
      %s79 = sphi 0, %s78
      %s93 = sphi 0, %s79
      %s97 = sphi 0, %s97
      %s99 = sphi 0, %s97
      %s100 = sphi 0, %s99
      %s114 = sphi 0, %s100
      %s118 = sphi 0, %s118
      %s120 = sphi 0, %s118
      %s121 = sphi 0, %s120
      %s135 = sphi 0, %s121
      %s139 = sphi 0, %s139
      %s141 = sphi 0, %s139
      %s142 = sphi 0, %s141
      %s156 = sphi 0, %s142
      %s160 = sphi 0, %s160
      %s162 = sphi 0, %s160
      %s163 = sphi 0, %s162
      %s177 = sphi 0, %s163
      %s181 = sphi 0, %s181
      %s183 = sphi 0, %s181
      %s184 = sphi 0, %s183
      %s198 = sphi 0, %s184
      %s202 = sphi 0, %s202
      %s204 = sphi 0, %s202
      %s205 = sphi 0, %s204
      %s219 = sphi 0, %s205
      %s225 = sphi 0, %s227
      %s228 = sphi 0, %s225
      %s229 = sphi 0, %s228
      %s245 = sphi 0, %s229
    $region4: #{tpu_custom_call.1} parent=1 // loop_header_branch
      %24 = sbr.rel (%p22) target = $region8
    $region5: #{tpu_custom_call.1} parent=1 // loop_body
      %s26 = ssub.s32 %s21, 1
      %s27 = ssub.s32 %s21, 2
      %s28 = sadd.s32 %s21, 1
      %s29 = ssub.s32 %s21, %s28
      %p30 = scmp.eq.s32.totalorder %s29, 0
      %s32 = sadd.s32 %s31, 1
      %s33 = scalar_select %p30, %s31, %s32
      %p36 = pneg %p30
      %p37 = scmp.eq.s32.totalorder %s21, 1
      %p38 = por %p36, %p37
      %p39 = scmp.ne.s32.totalorder %s31, %s34
      %p40 = scmp.eq.s32.totalorder %s21, 0
      %p41 = por %p39, %p40
      %p42 = scmp.ne.s32.totalorder %s31, %s34
      %p43 = scmp.eq.s32.totalorder %s26, 1
      %p44 = por %p42, %p43
      %p45 = scmp.ne.s32.totalorder %s34, %s35
      %p46 = scmp.eq.s32.totalorder %s26, 0
      %p47 = por %p45, %p46
      %p48 = scmp.ne.s32.totalorder %s34, %s35
      %p49 = scmp.eq.s32.totalorder %s27, 1
      %p50 = por %p48, %p49
      %p52 = scmp.ne.s32.totalorder %s35, %s51
      %p53 = scmp.eq.s32.totalorder %s27, 0
      %p54 = por %p52, %p53
      %s56 = sadd.s32 %s55, 1
      %p59 = scmp.eq.s32.totalorder %s21, 1
      %p60 = scmp.ne.s32.totalorder %s55, %s57
      %p61 = scmp.eq.s32.totalorder %s21, 0
      %p62 = por %p60, %p61
      %p63 = scmp.ne.s32.totalorder %s55, %s57
      %p64 = scmp.eq.s32.totalorder %s26, 1
      %p65 = por %p63, %p64
      %p66 = scmp.ne.s32.totalorder %s57, %s58
      %p67 = scmp.eq.s32.totalorder %s26, 0
      %p68 = por %p66, %p67
      %p69 = scmp.ne.s32.totalorder %s57, %s58
      %p70 = scmp.eq.s32.totalorder %s27, 1
      %p71 = por %p69, %p70
      %p73 = scmp.ne.s32.totalorder %s58, %s72
      %p74 = scmp.eq.s32.totalorder %s27, 0
      %p75 = por %p73, %p74
      %s77 = sadd.s32 %s76, 1
      %p80 = scmp.eq.s32.totalorder %s21, 1
      %p81 = scmp.ne.s32.totalorder %s76, %s78
      %p82 = scmp.eq.s32.totalorder %s21, 0
      %p83 = por %p81, %p82
      %p84 = scmp.ne.s32.totalorder %s76, %s78
      %p85 = scmp.eq.s32.totalorder %s26, 1
      %p86 = por %p84, %p85
      %p87 = scmp.ne.s32.totalorder %s78, %s79
      %p88 = scmp.eq.s32.totalorder %s26, 0
      %p89 = por %p87, %p88
      %p90 = scmp.ne.s32.totalorder %s78, %s79
      %p91 = scmp.eq.s32.totalorder %s27, 1
      %p92 = por %p90, %p91
      %p94 = scmp.ne.s32.totalorder %s79, %s93
      %p95 = scmp.eq.s32.totalorder %s27, 0
      %p96 = por %p94, %p95
      %s98 = sadd.s32 %s97, 1
      %p101 = scmp.eq.s32.totalorder %s21, 1
      %p102 = scmp.ne.s32.totalorder %s97, %s99
      %p103 = scmp.eq.s32.totalorder %s21, 0
      %p104 = por %p102, %p103
      %p105 = scmp.ne.s32.totalorder %s97, %s99
      %p106 = scmp.eq.s32.totalorder %s26, 1
      %p107 = por %p105, %p106
      %p108 = scmp.ne.s32.totalorder %s99, %s100
      %p109 = scmp.eq.s32.totalorder %s26, 0
      %p110 = por %p108, %p109
      %p111 = scmp.ne.s32.totalorder %s99, %s100
      %p112 = scmp.eq.s32.totalorder %s27, 1
      %p113 = por %p111, %p112
      %p115 = scmp.ne.s32.totalorder %s100, %s114
      %p116 = scmp.eq.s32.totalorder %s27, 0
      %p117 = por %p115, %p116
      %s119 = sadd.s32 %s118, 1
      %p122 = scmp.eq.s32.totalorder %s21, 1
      %p123 = scmp.ne.s32.totalorder %s118, %s120
      %p124 = scmp.eq.s32.totalorder %s21, 0
      %p125 = por %p123, %p124
      %p126 = scmp.ne.s32.totalorder %s118, %s120
      %p127 = scmp.eq.s32.totalorder %s26, 1
      %p128 = por %p126, %p127
      %p129 = scmp.ne.s32.totalorder %s120, %s121
      %p130 = scmp.eq.s32.totalorder %s26, 0
      %p131 = por %p129, %p130
      %p132 = scmp.ne.s32.totalorder %s120, %s121
      %p133 = scmp.eq.s32.totalorder %s27, 1
      %p134 = por %p132, %p133
      %p136 = scmp.ne.s32.totalorder %s121, %s135
      %p137 = scmp.eq.s32.totalorder %s27, 0
      %p138 = por %p136, %p137
      %s140 = sadd.s32 %s139, 1
      %p143 = scmp.eq.s32.totalorder %s21, 1
      %p144 = scmp.ne.s32.totalorder %s139, %s141
      %p145 = scmp.eq.s32.totalorder %s21, 0
      %p146 = por %p144, %p145
      %p147 = scmp.ne.s32.totalorder %s139, %s141
      %p148 = scmp.eq.s32.totalorder %s26, 1
      %p149 = por %p147, %p148
      %p150 = scmp.ne.s32.totalorder %s141, %s142
      %p151 = scmp.eq.s32.totalorder %s26, 0
      %p152 = por %p150, %p151
      %p153 = scmp.ne.s32.totalorder %s141, %s142
      %p154 = scmp.eq.s32.totalorder %s27, 1
      %p155 = por %p153, %p154
      %p157 = scmp.ne.s32.totalorder %s142, %s156
      %p158 = scmp.eq.s32.totalorder %s27, 0
      %p159 = por %p157, %p158
      %s161 = sadd.s32 %s160, 1
      %p164 = scmp.eq.s32.totalorder %s21, 1
      %p165 = scmp.ne.s32.totalorder %s160, %s162
      %p166 = scmp.eq.s32.totalorder %s21, 0
      %p167 = por %p165, %p166
      %p168 = scmp.ne.s32.totalorder %s160, %s162
      %p169 = scmp.eq.s32.totalorder %s26, 1
      %p170 = por %p168, %p169
      %p171 = scmp.ne.s32.totalorder %s162, %s163
      %p172 = scmp.eq.s32.totalorder %s26, 0
      %p173 = por %p171, %p172
      %p174 = scmp.ne.s32.totalorder %s162, %s163
      %p175 = scmp.eq.s32.totalorder %s27, 1
      %p176 = por %p174, %p175
      %p178 = scmp.ne.s32.totalorder %s163, %s177
      %p179 = scmp.eq.s32.totalorder %s27, 0
      %p180 = por %p178, %p179
      %s182 = sadd.s32 %s181, 1
      %p185 = scmp.eq.s32.totalorder %s21, 1
      %p186 = scmp.ne.s32.totalorder %s181, %s183
      %p187 = scmp.eq.s32.totalorder %s21, 0
      %p188 = por %p186, %p187
      %p189 = scmp.ne.s32.totalorder %s181, %s183
      %p190 = scmp.eq.s32.totalorder %s26, 1
      %p191 = por %p189, %p190
      %p192 = scmp.ne.s32.totalorder %s183, %s184
      %p193 = scmp.eq.s32.totalorder %s26, 0
      %p194 = por %p192, %p193
      %p195 = scmp.ne.s32.totalorder %s183, %s184
      %p196 = scmp.eq.s32.totalorder %s27, 1
      %p197 = por %p195, %p196
      %p199 = scmp.ne.s32.totalorder %s184, %s198
      %p200 = scmp.eq.s32.totalorder %s27, 0
      %p201 = por %p199, %p200
      %s203 = sadd.s32 %s202, 1
      %p206 = scmp.eq.s32.totalorder %s21, 1
      %p207 = scmp.ne.s32.totalorder %s202, %s204
      %p208 = scmp.eq.s32.totalorder %s21, 0
      %p209 = por %p207, %p208
      %p210 = scmp.ne.s32.totalorder %s202, %s204
      %p211 = scmp.eq.s32.totalorder %s26, 1
      %p212 = por %p210, %p211
      %p213 = scmp.ne.s32.totalorder %s204, %s205
      %p214 = scmp.eq.s32.totalorder %s26, 0
      %p215 = por %p213, %p214
      %p216 = scmp.ne.s32.totalorder %s204, %s205
      %p217 = scmp.eq.s32.totalorder %s27, 1
      %p218 = por %p216, %p217
      %p220 = scmp.ne.s32.totalorder %s205, %s219
      %p221 = scmp.eq.s32.totalorder %s27, 0
      %p222 = por %p220, %p221
      %s223 = ssub.s32 %s21, %s28
      %p224 = scmp.eq.s32.totalorder %s223, 0
      %s226 = sadd.s32 %s225, 1
      %s227 = scalar_select %p224, %s225, %s226
      %p230 = pneg %p224
      %p231 = scmp.eq.s32.totalorder %s21, 1
      %p232 = por %p230, %p231
      %p233 = scmp.ne.s32.totalorder %s225, %s228
      %p234 = scmp.eq.s32.totalorder %s21, 0
      %p235 = por %p233, %p234
      %p236 = scmp.ne.s32.totalorder %s225, %s228
      %p237 = scmp.eq.s32.totalorder %s26, 1
      %p238 = por %p236, %p237
      %p239 = scmp.ne.s32.totalorder %s228, %s229
      %p240 = scmp.eq.s32.totalorder %s26, 0
      %p241 = por %p239, %p240
      %p242 = scmp.ne.s32.totalorder %s228, %s229
      %p243 = scmp.eq.s32.totalorder %s27, 1
      %p244 = por %p242, %p243
      %p246 = scmp.ne.s32.totalorder %s229, %s245
      %p247 = scmp.eq.s32.totalorder %s27, 0
      %p248 = por %p246, %p247
      %p249 = scmp.le.s32.totalorder 1, %s21
      %p250 = scmp.lt.s32.totalorder %s21, 3
      %p251 = pnand %p249, %p250
      %p252 = pneg %p251
      // Predicated region
      $region9: #{tpu_custom_call.1} parent=5 // pred_check
        _
      $region10: #{tpu_custom_call.1} parent=5 // pred_check_branch
        %254 = sbr.rel (%p251) target = $region12
      $region11: #{tpu_custom_call.1} parent=5 // pred_region
        %s255 = ssub.s32 %s21, 1
        // Predicated region
        $region13: #{tpu_custom_call.1} parent=11 // pred_check
          %p256 = pneg %p68
        $region14: #{tpu_custom_call.1} parent=11 // pred_check_branch
          %258 = sbr.rel (%p256) target = $region16
        $region15: #{tpu_custom_call.1} parent=11 // pred_region
          _
        $region16: #{tpu_custom_call.1} parent=11 // pred_fallthru
          _
        // Predicated region
        $region17: #{tpu_custom_call.1} parent=11 // pred_check
          %p259 = pneg %p89
        $region18: #{tpu_custom_call.1} parent=11 // pred_check_branch
          %261 = sbr.rel (%p259) target = $region20
        $region19: #{tpu_custom_call.1} parent=11 // pred_region
          _
        $region20: #{tpu_custom_call.1} parent=11 // pred_fallthru
          _
        // Predicated region
        $region21: #{tpu_custom_call.1} parent=11 // pred_check
          %p262 = pneg %p110
        $region22: #{tpu_custom_call.1} parent=11 // pred_check_branch
          %264 = sbr.rel (%p262) target = $region24
        $region23: #{tpu_custom_call.1} parent=11 // pred_region
          _
        $region24: #{tpu_custom_call.1} parent=11 // pred_fallthru
          _
        // Predicated region
        $region25: #{tpu_custom_call.1} parent=11 // pred_check
          %p265 = pneg %p131
        $region26: #{tpu_custom_call.1} parent=11 // pred_check_branch
          %267 = sbr.rel (%p265) target = $region28
        $region27: #{tpu_custom_call.1} parent=11 // pred_region
          _
        $region28: #{tpu_custom_call.1} parent=11 // pred_fallthru
          _
        // Predicated region
        $region29: #{tpu_custom_call.1} parent=11 // pred_check
          %p268 = pneg %p152
        $region30: #{tpu_custom_call.1} parent=11 // pred_check_branch
          %270 = sbr.rel (%p268) target = $region32
        $region31: #{tpu_custom_call.1} parent=11 // pred_region
          _
        $region32: #{tpu_custom_call.1} parent=11 // pred_fallthru
          _
        // Predicated region
        $region33: #{tpu_custom_call.1} parent=11 // pred_check
          %p271 = pneg %p173
        $region34: #{tpu_custom_call.1} parent=11 // pred_check_branch
          %273 = sbr.rel (%p271) target = $region36
        $region35: #{tpu_custom_call.1} parent=11 // pred_region
          _
        $region36: #{tpu_custom_call.1} parent=11 // pred_fallthru
          _
        // Predicated region
        $region37: #{tpu_custom_call.1} parent=11 // pred_check
          %p274 = pneg %p194
        $region38: #{tpu_custom_call.1} parent=11 // pred_check_branch
          %276 = sbr.rel (%p274) target = $region40
        $region39: #{tpu_custom_call.1} parent=11 // pred_region
          _
        $region40: #{tpu_custom_call.1} parent=11 // pred_fallthru
          _
        // Predicated region
        $region41: #{tpu_custom_call.1} parent=11 // pred_check
          %p277 = pneg %p215
        $region42: #{tpu_custom_call.1} parent=11 // pred_check_branch
          %279 = sbr.rel (%p277) target = $region44
        $region43: #{tpu_custom_call.1} parent=11 // pred_region
          _
        $region44: #{tpu_custom_call.1} parent=11 // pred_fallthru
          _
      $region12: #{tpu_custom_call.1} parent=5 // pred_fallthru
        _
      %p280 = scmp.lt.s32.totalorder %s21, 2
      // Predicated region
      $region45: #{tpu_custom_call.1} parent=5 // pred_check
        %p281 = pneg %p280
      $region46: #{tpu_custom_call.1} parent=5 // pred_check_branch
        %283 = sbr.rel (%p281) target = $region48
      $region47: #{tpu_custom_call.1} parent=5 // pred_region
        // Predicated region
        $region49: #{tpu_custom_call.1} parent=47 // pred_check
          %p284 = pneg %p41
        $region50: #{tpu_custom_call.1} parent=47 // pred_check_branch
          %286 = sbr.rel (%p284) target = $region52
        $region51: #{tpu_custom_call.1} parent=47 // pred_region
          %s287 = sand.u32 %s31, 1
          %s288 = scalar_lea.sflag [#allocation4], %s287
          %s289 = sand.u32 %s31, 1
          %s290 = smul.addr %s289, 64
          %s291 = scalar_lea.vmem [#allocation3], %s290
          %293 = vsyncadd %s288, 0
          %s294 = smul.addr %s21, 8
          %s295 = smul.addr %s294, 8
          %s296 = scalar_lea.hbm %s0, %s295
          %s297 = sshll.u32 %s296, 4
          %s298 = int_to_ptr.hbm [resolvable:$true] %s297
          %s299 = sshll.u32 %s291, 4
          %s300 = int_to_ptr.vmem [resolvable:$true] %s299
          %305 = dma.hbm_to_vmem [thread:$0]  %s298, 1024, %s300, %s288, 256, 256, 16
        $region52: #{tpu_custom_call.1} parent=47 // pred_fallthru
          _
      $region48: #{tpu_custom_call.1} parent=5 // pred_fallthru
        _
      %p306 = scmp.le.s32.totalorder 1, %s21
      %p307 = scmp.lt.s32.totalorder %s21, 3
      %p308 = pnand %p306, %p307
      %p309 = pneg %p308
      // Predicated region
      $region53: #{tpu_custom_call.1} parent=5 // pred_check
        _
      $region54: #{tpu_custom_call.1} parent=5 // pred_check_branch
        %311 = sbr.rel (%p308) target = $region56
      $region55: #{tpu_custom_call.1} parent=5 // pred_region
        %s312 = ssub.s32 %s21, 1
        %s313 = sand.u32 %s34, 1
        %s314 = scalar_lea.sflag [#allocation4], %s313
        %s315 = sand.u32 %s34, 1
        %s316 = smul.addr %s315, 64
        %s317 = scalar_lea.vmem [#allocation3], %s316
        // Predicated region
        $region57: #{tpu_custom_call.1} parent=55 // pred_check
          %p318 = pneg %p47
        $region58: #{tpu_custom_call.1} parent=55 // pred_check_branch
          %320 = sbr.rel (%p318) target = $region60
        $region59: #{tpu_custom_call.1} parent=55 // pred_region
          %322 = dma.done %s314, 1024
        $region60: #{tpu_custom_call.1} parent=55 // pred_fallthru
          _
        %s323 = sand.u32 %s34, 1
        %s324 = scalar_lea.sflag [#allocation4], %s323
        %s325 = sand.u32 %s34, 1
        %s326 = smul.addr %s325, 64
        %s327 = scalar_lea.vmem [#allocation3], %s326
        %p328 = pneg %p47
        %p329 = pneg %p44
        %p330 = pneg %p68
        %p331 = pneg %p65
        %p332 = pneg %p89
        %p333 = pneg %p86
        %p334 = pneg %p110
        %p335 = pneg %p107
        %p336 = pneg %p131
        %p337 = pneg %p128
        %p338 = pneg %p152
        %p339 = pneg %p149
        %p340 = pneg %p173
        %p341 = pneg %p170
        %p342 = pneg %p194
        %p343 = pneg %p191
        %p344 = pneg %p215
        %p345 = pneg %p212
        %p346 = pneg %p241
        %p347 = pneg %p238
        %s348 = sand.u32 %s228, 1
        %s349 = scalar_lea.sflag [#allocation5], %s348
        %s350 = sand.u32 %s228, 1
        %s351 = smul.addr %s350, 64
        %s352 = scalar_lea.vmem [#allocation6], %s351
        %v353 = vld [vmem:[%s7] sm:$0x3]
        %v354 = vld [vmem:[%s8] sm:$0xff]
        %v355 = vld [vmem:[%s8 + $0x8] sm:$0xff]
        %v356 = vld [vmem:[%s8 + $0x10] sm:$0xff]
        %v357 = vld [vmem:[%s8 + $0x18] sm:$0xff]
        %358 = vst [vmem:[#allocation2] sm:$0xff] 0.0
        %359 = vst [vmem:[#allocation2 + $0x8] sm:$0xff] 0.0
        %360 = vst [vmem:[#allocation2 + $0x10] sm:$0xff] 0.0
        %361 = vst [vmem:[#allocation2 + $0x18] sm:$0xff] 0.0
        %362 = vst [vmem:[#allocation2 + $0x20] sm:$0x3] 0.0
        %363 = vst [vmem:[#allocation2 + $0x28] sm:$0x3] 0.0
        %v364 = vlaneseq
        %v365 = vand.u32 %v364, 127
        %v366 = vadd.s32 %v365, 128
        %v367 = vcvt.s32.f32 %v365
        %v368 = vcvt.s32.f32 %v366
        %v369 = vadd.f32 %v367, 0.5
        %v370 = vadd.f32 %v368, 0.5
        %v371 = vmul.f32 %v369, 0.0625
        %v372 = vmul.f32 %v370, 0.0625
        %v373 = vfloor.f32 %v371
        %v374 = vfloor.f32 %v372
        %v375 = vmul.f32 %v373, 16.0
        %v376 = vmul.f32 %v374, 16.0
        %v377 = vsub.f32 %v367, %v375
        %v378 = vsub.f32 %v368, %v376
        %v379 = vadd.f32 %v373, -4.0
        %v380 = vadd.f32 %v374, -4.0
        %vm381 = vcmp.ge.f32.partialorder %v379, 0.0
        %vm382 = vcmp.ge.f32.partialorder %v380, 0.0
        %vm383 = vcmp.le.f32.partialorder %v379, 15.0
        %vm384 = vcmp.le.f32.partialorder %v380, 15.0
        %vm385 = vmand %vm381, %vm383
        %vm386 = vmand %vm382, %vm384
        %v387 = vadd.f32 %v377, -4.0
        %v388 = vadd.f32 %v378, -4.0
        %vm389 = vcmp.ge.f32.partialorder %v387, 0.0
        %vm390 = vcmp.ge.f32.partialorder %v388, 0.0
        %vm391 = vmand %vm385, %vm389
        %vm392 = vmand %vm386, %vm390
        %vm393 = vcmp.le.f32.partialorder %v387, 15.0
        %vm394 = vcmp.le.f32.partialorder %v388, 15.0
        %vm395 = vmand %vm391, %vm393
        %vm396 = vmand %vm392, %vm394
        %v397 = vsel %vm395, 1.0, 0.0
        %v398 = vsel %vm396, 1.0, 0.0
        %v399 = vadd.f32 %v377, 0.0
        %v400 = vadd.f32 %v378, 0.0
        %vm401 = vcmp.ge.f32.partialorder %v399, 0.0
        %vm402 = vcmp.ge.f32.partialorder %v400, 0.0
        %vm403 = vmand %vm385, %vm401
        %vm404 = vmand %vm386, %vm402
        %vm405 = vcmp.le.f32.partialorder %v399, 15.0
        %vm406 = vcmp.le.f32.partialorder %v400, 15.0
        %vm407 = vmand %vm403, %vm405
        %vm408 = vmand %vm404, %vm406
        %v409 = vsel %vm407, 1.0, 0.0
        %v410 = vsel %vm408, 1.0, 0.0
        %v411 = vadd.f32 %v377, 4.0
        %v412 = vadd.f32 %v378, 4.0
        %vm413 = vcmp.ge.f32.partialorder %v411, 0.0
        %vm414 = vcmp.ge.f32.partialorder %v412, 0.0
        %vm415 = vmand %vm385, %vm413
        %vm416 = vmand %vm386, %vm414
        %vm417 = vcmp.le.f32.partialorder %v411, 15.0
        %vm418 = vcmp.le.f32.partialorder %v412, 15.0
        %vm419 = vmand %vm415, %vm417
        %vm420 = vmand %vm416, %vm418
        %v421 = vsel %vm419, 1.0, 0.0
        %v422 = vsel %vm420, 1.0, 0.0
        %v423 = vadd.f32 %v373, 0.0
        %v424 = vadd.f32 %v374, 0.0
        %vm425 = vcmp.ge.f32.partialorder %v423, 0.0
        %vm426 = vcmp.ge.f32.partialorder %v424, 0.0
        %vm427 = vcmp.le.f32.partialorder %v423, 15.0
        %vm428 = vcmp.le.f32.partialorder %v424, 15.0
        %vm429 = vmand %vm425, %vm427
        %vm430 = vmand %vm426, %vm428
        %vm431 = vmand %vm429, %vm389
        %vm432 = vmand %vm430, %vm390
        %vm433 = vmand %vm431, %vm393
        %vm434 = vmand %vm432, %vm394
        %v435 = vsel %vm433, 1.0, 0.0
        %v436 = vsel %vm434, 1.0, 0.0
        %vm437 = vmand %vm429, %vm401
        %vm438 = vmand %vm430, %vm402
        %vm439 = vmand %vm437, %vm405
        %vm440 = vmand %vm438, %vm406
        %v441 = vsel %vm439, 1.0, 0.0
        %v442 = vsel %vm440, 1.0, 0.0
        %vm443 = vmand %vm429, %vm413
        %vm444 = vmand %vm430, %vm414
        %vm445 = vmand %vm443, %vm417
        %vm446 = vmand %vm444, %vm418
        %v447 = vsel %vm445, 1.0, 0.0
        %v448 = vsel %vm446, 1.0, 0.0
        %v449 = vadd.f32 %v373, 4.0
        %v450 = vadd.f32 %v374, 4.0
        %vm451 = vcmp.ge.f32.partialorder %v449, 0.0
        %vm452 = vcmp.ge.f32.partialorder %v450, 0.0
        %vm453 = vcmp.le.f32.partialorder %v449, 15.0
        %vm454 = vcmp.le.f32.partialorder %v450, 15.0
        %vm455 = vmand %vm451, %vm453
        %vm456 = vmand %vm452, %vm454
        %vm457 = vmand %vm455, %vm389
        %vm458 = vmand %vm456, %vm390
        %vm459 = vmand %vm457, %vm393
        %vm460 = vmand %vm458, %vm394
        %v461 = vsel %vm459, 1.0, 0.0
        %v462 = vsel %vm460, 1.0, 0.0
        %vm463 = vmand %vm455, %vm401
        %vm464 = vmand %vm456, %vm402
        %vm465 = vmand %vm463, %vm405
        %vm466 = vmand %vm464, %vm406
        %v467 = vsel %vm465, 1.0, 0.0
        %v468 = vsel %vm466, 1.0, 0.0
        %vm469 = vmand %vm455, %vm413
        %vm470 = vmand %vm456, %vm414
        %vm471 = vmand %vm469, %vm417
        %vm472 = vmand %vm470, %vm418
        %v473 = vsel %vm471, 1.0, 0.0
        %v474 = vsel %vm472, 1.0, 0.0
        %v475 = vld [vmem:[%s317] sm:$0xff]
        %v476 = vld [vmem:[%s317 + $0x8] sm:$0xff]
        %v477 = vld [vmem:[%s317 + $0x10] sm:$0xff]
        %v478 = vld [vmem:[%s317 + $0x18] sm:$0xff]
        %v479 = vld [vmem:[%s317 + $0x20] sm:$0xff]
        %v480 = vld [vmem:[%s317 + $0x28] sm:$0xff]
        %v481 = vld [vmem:[%s317 + $0x30] sm:$0xff]
        %v482 = vld [vmem:[%s317 + $0x38] sm:$0xff]
        %v483 = vadd.f32 %v475, %v476
        %484 = vadd.xlane.f32.xlu0 %v483
        %v485 = vpop.xlane.xlu0 %484
        %v486 = vadd.f32 %v477, %v478
        %487 = vadd.xlane.f32.xlu0 %v486
        %v488 = vpop.xlane.xlu0 %487
        %v489 = vadd.f32 %v479, %v480
        %490 = vadd.xlane.f32.xlu0 %v489
        %v491 = vpop.xlane.xlu0 %490
        %v492 = vadd.f32 %v481, %v482
        %493 = vadd.xlane.f32.xlu0 %v492
        %v494 = vpop.xlane.xlu0 %493
        %v495 = vrcp.pop 256.0
        %v496 = vmul.f32 256.0, %v495
        %v497 = vsub.f32 1.0, %v496
        %v498 = vmul.f32 %v495, %v497
        %v499 = vadd.f32 %v495, %v498
        %vm500 = vweird.f32 %v495
        %v501 = vsel %vm500, %v495, %v499
        %v502 = vmul.f32 %v485, %v501
        %v503 = vmul.f32 %v488, %v501
        %v504 = vmul.f32 %v491, %v501
        %v505 = vmul.f32 %v494, %v501
        %v506 = vld [vmem:[%s1] sm:$0x3]
        %vm507 = vcmask 261120
        %v509 = vsel %vm507, %v506, 0
        %511 = vmatpush.msra.mxu0 0.0
        %512 = vmatpush.msra.mxu0 0.0
        %513 = vmatpush.msra.mxu0 0.0
        %514 = vmatpush.msra.mxu0 0.0
        %515 = vmatpush.msra.mxu0 0.0
        %516 = vmatpush.msra.mxu0 0.0
        %517 = vmatpush.msra.mxu0 0.0
        %518 = vmatpush.msra.mxu0 0.0
        %519 = vmatpush.msra.mxu0 0.0
        %520 = vmatpush.msra.mxu0 0.0
        %521 = vmatpush.msra.mxu0 0.0
        %522 = vmatpush.msra.mxu0 0.0
        %523 = vmatpush.msra.mxu0 %v505
        %524 = vmatpush.msra.mxu0 %v504
        %525 = vmatpush.msra.mxu0 %v503
        %526 = vmatpush.msra.mxu0 %v502
        %527 = vmatmul.f32.gmra.mxu0 %v509
        %v528 = vpop.f32.mrf.mxu0
        %v529 = vadd.f32 %v353, %v528
        %530 = vdwg.mxu0
        %v531 = vmax.f32 %v529, 0.0
        %v532 = vld [vmem:[%s2] sm:$0xff]
        %v533 = vld [vmem:[%s2 + $0x8] sm:$0xff]
        %v534 = vld [vmem:[%s2 + $0x10] sm:$0xff]
        %v535 = vld [vmem:[%s2 + $0x18] sm:$0xff]
        %vm536 = vcmask 15360
        %v538 = vsel %vm536, %v532, 0
        %v541 = vsel %vm536, %v533, 0
        %v544 = vsel %vm536, %v534, 0
        %v547 = vsel %vm536, %v535, 0
        %vm549 = vcmask 1041408
        %v551 = vsel %vm549, %v531, 0
        %553 = vmatpush.msra.mxu0 0.0
        %554 = vmatpush.msra.mxu0 0.0
        %555 = vmatpush.msra.mxu0 0.0
        %556 = vmatpush.msra.mxu0 0.0
        %557 = vmatpush.msra.mxu0 0.0
        %558 = vmatpush.msra.mxu0 0.0
        %559 = vmatpush.msra.mxu0 0.0
        %560 = vmatpush.msra.mxu0 0.0
        %561 = vmatpush.msra.mxu0 0.0
        %562 = vmatpush.msra.mxu0 0.0
        %563 = vmatpush.msra.mxu0 0.0
        %564 = vmatpush.msra.mxu0 0.0
        %565 = vmatpush.msra.mxu0 0.0
        %566 = vmatpush.msra.mxu0 0.0
        %567 = vmatpush.msra.mxu0 0.0
        %568 = vmatpush.msra.mxu0 %v551
        %569 = vmatmul.f32.gmra.mxu0 %v538
        %v570 = vpop.f32.mrf.mxu0
        %v571 = vadd.f32 %v354, %v570
        %572 = vmatmul.f32.gmra.mxu0 %v541
        %v573 = vpop.f32.mrf.mxu0
        %v574 = vadd.f32 %v355, %v573
        %575 = vmatmul.f32.gmra.mxu0 %v544
        %v576 = vpop.f32.mrf.mxu0
        %v577 = vadd.f32 %v356, %v576
        %578 = vmatmul.f32.gmra.mxu0 %v547
        %v579 = vpop.f32.mrf.mxu0
        %v580 = vadd.f32 %v357, %v579
        %581 = vdwg.mxu0
        %v582 = vld [vmem:[%s3] sm:$0x3]
        %584 = vset.pattern.permute.xlu0 1
        %585 = vperm.xlu0 %584, %v353
        %v586 = vpop.permute.xlu0 %585
        %v589 = vsel %vm507, %v582, 0
        %591 = vmatpush.msra.mxu0 0.0
        %592 = vmatpush.msra.mxu0 0.0
        %593 = vmatpush.msra.mxu0 0.0
        %594 = vmatpush.msra.mxu0 0.0
        %595 = vmatpush.msra.mxu0 0.0
        %596 = vmatpush.msra.mxu0 0.0
        %597 = vmatpush.msra.mxu0 0.0
        %598 = vmatpush.msra.mxu0 0.0
        %599 = vmatpush.msra.mxu0 0.0
        %600 = vmatpush.msra.mxu0 0.0
        %601 = vmatpush.msra.mxu0 0.0
        %602 = vmatpush.msra.mxu0 0.0
        %603 = vmatpush.msra.mxu0 %v481
        %604 = vmatpush.msra.mxu0 %v479
        %605 = vmatpush.msra.mxu0 %v477
        %606 = vmatpush.msra.mxu0 %v475
        %607 = vmatmul.f32.gmra.mxu0 %v589
        %v608 = vpop.f32.mrf.mxu0
        %v609 = vadd.f32 %v586, %v608
        %610 = vdwg.mxu0
        %611 = vmatpush.msra.mxu0 0.0
        %612 = vmatpush.msra.mxu0 0.0
        %613 = vmatpush.msra.mxu0 0.0
        %614 = vmatpush.msra.mxu0 0.0
        %615 = vmatpush.msra.mxu0 0.0
        %616 = vmatpush.msra.mxu0 0.0
        %617 = vmatpush.msra.mxu0 0.0
        %618 = vmatpush.msra.mxu0 0.0
        %619 = vmatpush.msra.mxu0 0.0
        %620 = vmatpush.msra.mxu0 0.0
        %621 = vmatpush.msra.mxu0 0.0
        %622 = vmatpush.msra.mxu0 0.0
        %623 = vmatpush.msra.mxu0 %v482
        %624 = vmatpush.msra.mxu0 %v480
        %625 = vmatpush.msra.mxu0 %v478
        %626 = vmatpush.msra.mxu0 %v476
        %627 = vmatmul.f32.gmra.mxu0 %v589
        %v628 = vpop.f32.mrf.mxu0
        %v629 = vadd.f32 %v586, %v628
        %630 = vdwg.mxu0
        %v631 = vmax.f32 %v609, 0.0
        %v632 = vmax.f32 %v629, 0.0
        %v633 = vld [vmem:[%s4] sm:$0x3]
        %636 = vrot.lane.b32.xlu0 %v397, 60
        %v637 = vpop.permute.xlu0 %636
        %638 = vrot.lane.b32.xlu0 %v398, 60
        %v639 = vpop.permute.xlu0 %638
        %vm640 = vcmask 490496
        %v641 = vsel %vm640, %v637, %v639
        %v644 = vmul.f32 %v631, %v641
        %v645 = vmul.f32 %v632, %v639
        %648 = vrot.lane.b32.xlu0 %v644, 68
        %v649 = vpop.permute.xlu0 %648
        %650 = vrot.lane.b32.xlu0 %v645, 68
        %v651 = vpop.permute.xlu0 %650
        %vm652 = vcmask 556032
        %v653 = vsel %vm652, %v649, %v651
        %vm656 = vcmask 1041952
        %657 = vst.msk [vmem:[#allocation2] sm:$0x3] %vm656, %v649
        %658 = vst [vmem:[#allocation2 + $0x8] sm:$0x3] %v653
        %661 = vrot.lane.b32.xlu0 %v409, 64
        %v662 = vpop.permute.xlu0 %661
        %663 = vrot.lane.b32.xlu0 %v410, 64
        %v664 = vpop.permute.xlu0 %663
        %vm665 = vcmask 523264
        %v666 = vsel %vm665, %v662, %v664
        %v669 = vmul.f32 %v631, %v666
        %v670 = vmul.f32 %v632, %v664
        %v673 = vrot.slane %v669, 6
        %v674 = vrot.slane %v670, 6
        %675 = vrot.lane.b32.xlu0 %v673, 64
        %v676 = vpop.permute.xlu0 %675
        %677 = vrot.lane.b32.xlu0 %v674, 64
        %v678 = vpop.permute.xlu0 %677
        %v679 = vsel %vm665, %v676, %v678
        %vm682 = vcmask 1043970
        %683 = vst.msk [vmem:[#allocation2] sm:$0xc] %vm682, %v676
        %684 = vst [vmem:[#allocation2 + $0x8] sm:$0xc] %v679
        %687 = vrot.lane.b32.xlu0 %v421, 68
        %v688 = vpop.permute.xlu0 %687
        %689 = vrot.lane.b32.xlu0 %v422, 68
        %v690 = vpop.permute.xlu0 %689
        %v691 = vsel %vm652, %v688, %v690
        %v694 = vmul.f32 %v631, %v691
        %v695 = vmul.f32 %v632, %v690
        %v698 = vrot.slane %v694, 4
        %v699 = vrot.slane %v695, 4
        %700 = vrot.lane.b32.xlu0 %v698, 60
        %v701 = vpop.permute.xlu0 %700
        %702 = vrot.lane.b32.xlu0 %v699, 60
        %v703 = vpop.permute.xlu0 %702
        %v704 = vsel %vm640, %v701, %v703
        %vm707 = vcmask 1045988
        %708 = vst.msk [vmem:[#allocation2] sm:$0x30] %vm707, %v701
        %709 = vst [vmem:[#allocation2 + $0x8] sm:$0x30] %v704
        %712 = vrot.lane.b32.xlu0 %v435, 124
        %v713 = vpop.permute.xlu0 %712
        %714 = vrot.lane.b32.xlu0 %v436, 124
        %v715 = vpop.permute.xlu0 %714
        %vm716 = vcmask 1014784
        %v717 = vsel %vm716, %v713, %v715
        %v720 = vmul.f32 %v631, %v717
        %v721 = vmul.f32 %v632, %v715
        %v724 = vrot.slane %v720, 2
        %v725 = vrot.slane %v721, 2
        %726 = vrot.lane.b32.xlu0 %v724, 4
        %v727 = vpop.permute.xlu0 %726
        %728 = vrot.lane.b32.xlu0 %v725, 4
        %v729 = vpop.permute.xlu0 %728
        %vm730 = vcmask 31744
        %v731 = vsel %vm730, %v727, %v729
        %vm734 = vcmask 1047590
        %735 = vst.msk [vmem:[#allocation2] sm:$0xc0] %vm734, %v727
        %736 = vst [vmem:[#allocation2 + $0x8] sm:$0xc0] %v731
        %v737 = vmul.f32 %v631, %v441
        %v738 = vmul.f32 %v632, %v442
        %739 = vst [vmem:[#allocation2 + $0x10] sm:$0x3] %v737
        %740 = vst [vmem:[#allocation2 + $0x18] sm:$0x3] %v738
        %743 = vrot.lane.b32.xlu0 %v447, 4
        %v744 = vpop.permute.xlu0 %743
        %745 = vrot.lane.b32.xlu0 %v448, 4
        %v746 = vpop.permute.xlu0 %745
        %v747 = vsel %vm730, %v744, %v746
        %v750 = vmul.f32 %v631, %v744
        %v751 = vmul.f32 %v632, %v747
        %v754 = vrot.slane %v750, 6
        %v755 = vrot.slane %v751, 6
        %756 = vrot.lane.b32.xlu0 %v754, 124
        %v757 = vpop.permute.xlu0 %756
        %758 = vrot.lane.b32.xlu0 %v755, 124
        %v759 = vpop.permute.xlu0 %758
        %v760 = vsel %vm716, %v757, %v759
        %763 = vst [vmem:[#allocation2 + $0x10] sm:$0xc] %v760
        %vm764 = vcmask 1010690
        %765 = vst.msk [vmem:[#allocation2 + $0x18] sm:$0xc] %vm764, %v759
        %768 = vrot.lane.b32.xlu0 %v461, 60
        %v769 = vpop.permute.xlu0 %768
        %770 = vrot.lane.b32.xlu0 %v462, 60
        %v771 = vpop.permute.xlu0 %770
        %v772 = vsel %vm640, %v769, %v771
        %v775 = vmul.f32 %v631, %v769
        %v776 = vmul.f32 %v632, %v772
        %v779 = vrot.slane %v775, 4
        %v780 = vrot.slane %v776, 4
        %781 = vrot.lane.b32.xlu0 %v779, 68
        %v782 = vpop.permute.xlu0 %781
        %783 = vrot.lane.b32.xlu0 %v780, 68
        %v784 = vpop.permute.xlu0 %783
        %v785 = vsel %vm652, %v782, %v784
        %788 = vst [vmem:[#allocation2 + $0x10] sm:$0x30] %v785
        %vm789 = vcmask 553988
        %790 = vst.msk [vmem:[#allocation2 + $0x18] sm:$0x30] %vm789, %v784
        %793 = vrot.lane.b32.xlu0 %v467, 64
        %v794 = vpop.permute.xlu0 %793
        %795 = vrot.lane.b32.xlu0 %v468, 64
        %v796 = vpop.permute.xlu0 %795
        %v797 = vsel %vm665, %v794, %v796
        %v800 = vmul.f32 %v631, %v794
        %v801 = vmul.f32 %v632, %v797
        %v804 = vrot.slane %v800, 2
        %v805 = vrot.slane %v801, 2
        %806 = vrot.lane.b32.xlu0 %v804, 64
        %v807 = vpop.permute.xlu0 %806
        %808 = vrot.lane.b32.xlu0 %v805, 64
        %v809 = vpop.permute.xlu0 %808
        %v810 = vsel %vm665, %v807, %v809
        %813 = vst [vmem:[#allocation2 + $0x10] sm:$0xc0] %v810
        %vm814 = vcmask 523270
        %815 = vst.msk [vmem:[#allocation2 + $0x18] sm:$0xc0] %vm814, %v809
        %818 = vrot.lane.b32.xlu0 %v473, 68
        %v819 = vpop.permute.xlu0 %818
        %820 = vrot.lane.b32.xlu0 %v474, 68
        %v821 = vpop.permute.xlu0 %820
        %v822 = vsel %vm652, %v819, %v821
        %v825 = vmul.f32 %v631, %v819
        %v826 = vmul.f32 %v632, %v822
        %829 = vrot.lane.b32.xlu0 %v825, 60
        %v830 = vpop.permute.xlu0 %829
        %831 = vrot.lane.b32.xlu0 %v826, 60
        %v832 = vpop.permute.xlu0 %831
        %v833 = vsel %vm640, %v830, %v832
        %836 = vst [vmem:[#allocation2 + $0x20] sm:$0x3] %v833
        %vm837 = vcmask 484352
        %838 = vst.msk [vmem:[#allocation2 + $0x28] sm:$0x3] %vm837, %v832
        %v839 = vld [vmem:[#allocation2] sm:$0xff]
        %v840 = vld [vmem:[#allocation2 + $0x8] sm:$0xff]
        %v841 = vld [vmem:[#allocation2 + $0x10] sm:$0xff]
        %v842 = vld [vmem:[#allocation2 + $0x18] sm:$0xff]
        %v843 = vld [vmem:[#allocation2 + $0x20] sm:$0x3]
        %v844 = vld [vmem:[#allocation2 + $0x28] sm:$0x3]
        %845 = vset.pattern.permute.xlu0 2
        %846 = vperm.xlu0 %845, %v353
        %v847 = vpop.permute.xlu0 %846
        %vm849 = vcmask 146432
        %v851 = vsel %vm849, %v633, 0
        %v854 = vsel %vm549, %v843, 0
        %v857 = vsel %vm549, %v844, 0
        %859 = vmatpush.msra.mxu0 0.0
        %860 = vmatpush.msra.mxu0 0.0
        %861 = vmatpush.msra.mxu0 0.0
        %862 = vmatpush.msra.mxu0 0.0
        %863 = vmatpush.msra.mxu0 0.0
        %864 = vmatpush.msra.mxu0 0.0
        %865 = vmatpush.msra.mxu0 0.0
        %866 = vmatpush.msra.mxu0 0.0
        %867 = vmatpush.msra.mxu0 0.0
        %868 = vmatpush.msra.mxu0 0.0
        %869 = vmatpush.msra.mxu0 0.0
        %870 = vmatpush.msra.mxu0 0.0
        %871 = vmatpush.msra.mxu0 0.0
        %872 = vmatpush.msra.mxu0 %v854
        %873 = vmatpush.msra.mxu0 %v841
        %874 = vmatpush.msra.mxu0 %v839
        %875 = vmatmul.f32.gmra.mxu0 %v851
        %v876 = vpop.f32.mrf.mxu0
        %v877 = vadd.f32 %v847, %v876
        %878 = vdwg.mxu0
        %879 = vmatpush.msra.mxu0 0.0
        %880 = vmatpush.msra.mxu0 0.0
        %881 = vmatpush.msra.mxu0 0.0
        %882 = vmatpush.msra.mxu0 0.0
        %883 = vmatpush.msra.mxu0 0.0
        %884 = vmatpush.msra.mxu0 0.0
        %885 = vmatpush.msra.mxu0 0.0
        %886 = vmatpush.msra.mxu0 0.0
        %887 = vmatpush.msra.mxu0 0.0
        %888 = vmatpush.msra.mxu0 0.0
        %889 = vmatpush.msra.mxu0 0.0
        %890 = vmatpush.msra.mxu0 0.0
        %891 = vmatpush.msra.mxu0 0.0
        %892 = vmatpush.msra.mxu0 %v857
        %893 = vmatpush.msra.mxu0 %v842
        %894 = vmatpush.msra.mxu0 %v840
        %895 = vmatmul.f32.gmra.mxu0 %v851
        %v896 = vpop.f32.mrf.mxu0
        %v897 = vadd.f32 %v847, %v896
        %898 = vdwg.mxu0
        %v899 = vmax.f32 %v877, 0.0
        %v900 = vmax.f32 %v897, 0.0
        %v901 = vld [vmem:[%s5] sm:$0x3]
        %v902 = vmul.f32 %v899, %v641
        %v903 = vmul.f32 %v900, %v639
        %906 = vrot.lane.b32.xlu0 %v902, 68
        %v907 = vpop.permute.xlu0 %906
        %908 = vrot.lane.b32.xlu0 %v903, 68
        %v909 = vpop.permute.xlu0 %908
        %v910 = vsel %vm652, %v907, %v909
        %913 = vst.msk [vmem:[#allocation2] sm:$0x3] %vm656, %v907
        %914 = vst [vmem:[#allocation2 + $0x8] sm:$0x3] %v910
        %v915 = vmul.f32 %v899, %v666
        %v916 = vmul.f32 %v900, %v664
        %v919 = vrot.slane %v915, 6
        %v920 = vrot.slane %v916, 6
        %921 = vrot.lane.b32.xlu0 %v919, 64
        %v922 = vpop.permute.xlu0 %921
        %923 = vrot.lane.b32.xlu0 %v920, 64
        %v924 = vpop.permute.xlu0 %923
        %v925 = vsel %vm665, %v922, %v924
        %928 = vst.msk [vmem:[#allocation2] sm:$0xc] %vm682, %v922
        %929 = vst [vmem:[#allocation2 + $0x8] sm:$0xc] %v925
        %v930 = vmul.f32 %v899, %v691
        %v931 = vmul.f32 %v900, %v690
        %v934 = vrot.slane %v930, 4
        %v935 = vrot.slane %v931, 4
        %936 = vrot.lane.b32.xlu0 %v934, 60
        %v937 = vpop.permute.xlu0 %936
        %938 = vrot.lane.b32.xlu0 %v935, 60
        %v939 = vpop.permute.xlu0 %938
        %v940 = vsel %vm640, %v937, %v939
        %943 = vst.msk [vmem:[#allocation2] sm:$0x30] %vm707, %v937
        %944 = vst [vmem:[#allocation2 + $0x8] sm:$0x30] %v940
        %v945 = vmul.f32 %v899, %v717
        %v946 = vmul.f32 %v900, %v715
        %v949 = vrot.slane %v945, 2
        %v950 = vrot.slane %v946, 2
        %951 = vrot.lane.b32.xlu0 %v949, 4
        %v952 = vpop.permute.xlu0 %951
        %953 = vrot.lane.b32.xlu0 %v950, 4
        %v954 = vpop.permute.xlu0 %953
        %v955 = vsel %vm730, %v952, %v954
        %958 = vst.msk [vmem:[#allocation2] sm:$0xc0] %vm734, %v952
        %959 = vst [vmem:[#allocation2 + $0x8] sm:$0xc0] %v955
        %v960 = vmul.f32 %v899, %v441
        %v961 = vmul.f32 %v900, %v442
        %962 = vst [vmem:[#allocation2 + $0x10] sm:$0x3] %v960
        %963 = vst [vmem:[#allocation2 + $0x18] sm:$0x3] %v961
        %v964 = vmul.f32 %v899, %v744
        %v965 = vmul.f32 %v900, %v747
        %v968 = vrot.slane %v964, 6
        %v969 = vrot.slane %v965, 6
        %970 = vrot.lane.b32.xlu0 %v968, 124
        %v971 = vpop.permute.xlu0 %970
        %972 = vrot.lane.b32.xlu0 %v969, 124
        %v973 = vpop.permute.xlu0 %972
        %v974 = vsel %vm716, %v971, %v973
        %977 = vst [vmem:[#allocation2 + $0x10] sm:$0xc] %v974
        %978 = vst.msk [vmem:[#allocation2 + $0x18] sm:$0xc] %vm764, %v973
        %v979 = vmul.f32 %v899, %v769
        %v980 = vmul.f32 %v900, %v772
        %v983 = vrot.slane %v979, 4
        %v984 = vrot.slane %v980, 4
        %985 = vrot.lane.b32.xlu0 %v983, 68
        %v986 = vpop.permute.xlu0 %985
        %987 = vrot.lane.b32.xlu0 %v984, 68
        %v988 = vpop.permute.xlu0 %987
        %v989 = vsel %vm652, %v986, %v988
        %992 = vst [vmem:[#allocation2 + $0x10] sm:$0x30] %v989
        %993 = vst.msk [vmem:[#allocation2 + $0x18] sm:$0x30] %vm789, %v988
        %v994 = vmul.f32 %v899, %v794
        %v995 = vmul.f32 %v900, %v797
        %v998 = vrot.slane %v994, 2
        %v999 = vrot.slane %v995, 2
        %1000 = vrot.lane.b32.xlu0 %v998, 64
        %v1001 = vpop.permute.xlu0 %1000
        %1002 = vrot.lane.b32.xlu0 %v999, 64
        %v1003 = vpop.permute.xlu0 %1002
        %v1004 = vsel %vm665, %v1001, %v1003
        %1007 = vst [vmem:[#allocation2 + $0x10] sm:$0xc0] %v1004
        %1008 = vst.msk [vmem:[#allocation2 + $0x18] sm:$0xc0] %vm814, %v1003
        %v1009 = vmul.f32 %v899, %v819
        %v1010 = vmul.f32 %v900, %v822
        %1013 = vrot.lane.b32.xlu0 %v1009, 60
        %v1014 = vpop.permute.xlu0 %1013
        %1015 = vrot.lane.b32.xlu0 %v1010, 60
        %v1016 = vpop.permute.xlu0 %1015
        %v1017 = vsel %vm640, %v1014, %v1016
        %1020 = vst [vmem:[#allocation2 + $0x20] sm:$0x3] %v1017
        %1021 = vst.msk [vmem:[#allocation2 + $0x28] sm:$0x3] %vm837, %v1016
        %v1022 = vld [vmem:[#allocation2] sm:$0xff]
        %v1023 = vld [vmem:[#allocation2 + $0x8] sm:$0xff]
        %v1024 = vld [vmem:[#allocation2 + $0x10] sm:$0xff]
        %v1025 = vld [vmem:[#allocation2 + $0x18] sm:$0xff]
        %v1026 = vld [vmem:[#allocation2 + $0x20] sm:$0x3]
        %v1027 = vld [vmem:[#allocation2 + $0x28] sm:$0x3]
        %1028 = vset.pattern.permute.xlu0 3
        %1029 = vperm.xlu0 %1028, %v353
        %v1030 = vpop.permute.xlu0 %1029
        %v1033 = vsel %vm849, %v901, 0
        %v1036 = vsel %vm549, %v1026, 0
        %v1039 = vsel %vm549, %v1027, 0
        %1041 = vmatpush.msra.mxu0 0.0
        %1042 = vmatpush.msra.mxu0 0.0
        %1043 = vmatpush.msra.mxu0 0.0
        %1044 = vmatpush.msra.mxu0 0.0
        %1045 = vmatpush.msra.mxu0 0.0
        %1046 = vmatpush.msra.mxu0 0.0
        %1047 = vmatpush.msra.mxu0 0.0
        %1048 = vmatpush.msra.mxu0 0.0
        %1049 = vmatpush.msra.mxu0 0.0
        %1050 = vmatpush.msra.mxu0 0.0
        %1051 = vmatpush.msra.mxu0 0.0
        %1052 = vmatpush.msra.mxu0 0.0
        %1053 = vmatpush.msra.mxu0 0.0
        %1054 = vmatpush.msra.mxu0 %v1036
        %1055 = vmatpush.msra.mxu0 %v1024
        %1056 = vmatpush.msra.mxu0 %v1022
        %1057 = vmatmul.f32.gmra.mxu0 %v1033
        %v1058 = vpop.f32.mrf.mxu0
        %v1059 = vadd.f32 %v1030, %v1058
        %1060 = vdwg.mxu0
        %1061 = vmatpush.msra.mxu0 0.0
        %1062 = vmatpush.msra.mxu0 0.0
        %1063 = vmatpush.msra.mxu0 0.0
        %1064 = vmatpush.msra.mxu0 0.0
        %1065 = vmatpush.msra.mxu0 0.0
        %1066 = vmatpush.msra.mxu0 0.0
        %1067 = vmatpush.msra.mxu0 0.0
        %1068 = vmatpush.msra.mxu0 0.0
        %1069 = vmatpush.msra.mxu0 0.0
        %1070 = vmatpush.msra.mxu0 0.0
        %1071 = vmatpush.msra.mxu0 0.0
        %1072 = vmatpush.msra.mxu0 0.0
        %1073 = vmatpush.msra.mxu0 0.0
        %1074 = vmatpush.msra.mxu0 %v1039
        %1075 = vmatpush.msra.mxu0 %v1025
        %1076 = vmatpush.msra.mxu0 %v1023
        %1077 = vmatmul.f32.gmra.mxu0 %v1033
        %v1078 = vpop.f32.mrf.mxu0
        %v1079 = vadd.f32 %v1030, %v1078
        %1080 = vdwg.mxu0
        %v1081 = vmax.f32 %v1059, 0.0
        %v1082 = vmax.f32 %v1079, 0.0
        %v1083 = vld [vmem:[%s6] sm:$0xff]
        %v1084 = vld [vmem:[%s6 + $0x8] sm:$0xff]
        %v1085 = vld [vmem:[%s6 + $0x10] sm:$0xff]
        %v1086 = vld [vmem:[%s6 + $0x18] sm:$0xff]
        %1088 = vset.pattern.permute.xlu0 1
        %1089 = vperm.xlu0 %1088, %v354
        %v1090 = vpop.permute.xlu0 %1089
        %1093 = vset.pattern.permute.xlu0 1
        %1094 = vperm.xlu0 %1093, %v355
        %v1095 = vpop.permute.xlu0 %1094
        %1098 = vset.pattern.permute.xlu0 1
        %1099 = vperm.xlu0 %1098, %v356
        %v1100 = vpop.permute.xlu0 %1099
        %1103 = vset.pattern.permute.xlu0 1
        %1104 = vperm.xlu0 %1103, %v357
        %v1105 = vpop.permute.xlu0 %1104
        %v1108 = vsel %vm536, %v1083, 0
        %v1111 = vsel %vm536, %v1084, 0
        %v1114 = vsel %vm536, %v1085, 0
        %v1117 = vsel %vm536, %v1086, 0
        %v1120 = vsel %vm549, %v1081, 0
        %v1123 = vsel %vm549, %v1082, 0
        %1125 = vmatpush.msra.mxu0 0.0
        %1126 = vmatpush.msra.mxu0 0.0
        %1127 = vmatpush.msra.mxu0 0.0
        %1128 = vmatpush.msra.mxu0 0.0
        %1129 = vmatpush.msra.mxu0 0.0
        %1130 = vmatpush.msra.mxu0 0.0
        %1131 = vmatpush.msra.mxu0 0.0
        %1132 = vmatpush.msra.mxu0 0.0
        %1133 = vmatpush.msra.mxu0 0.0
        %1134 = vmatpush.msra.mxu0 0.0
        %1135 = vmatpush.msra.mxu0 0.0
        %1136 = vmatpush.msra.mxu0 0.0
        %1137 = vmatpush.msra.mxu0 0.0
        %1138 = vmatpush.msra.mxu0 0.0
        %1139 = vmatpush.msra.mxu0 0.0
        %1140 = vmatpush.msra.mxu0 %v1120
        %1141 = vmatmul.f32.gmra.mxu0 %v1108
        %v1142 = vpop.f32.mrf.mxu0
        %v1143 = vadd.f32 %v1090, %v1142
        %1144 = vmatmul.f32.gmra.mxu0 %v1111
        %v1145 = vpop.f32.mrf.mxu0
        %v1146 = vadd.f32 %v1095, %v1145
        %1147 = vmatmul.f32.gmra.mxu0 %v1114
        %v1148 = vpop.f32.mrf.mxu0
        %v1149 = vadd.f32 %v1100, %v1148
        %1150 = vmatmul.f32.gmra.mxu0 %v1117
        %v1151 = vpop.f32.mrf.mxu0
        %v1152 = vadd.f32 %v1105, %v1151
        %1153 = vdwg.mxu0
        %1154 = vmatpush.msra.mxu0 0.0
        %1155 = vmatpush.msra.mxu0 0.0
        %1156 = vmatpush.msra.mxu0 0.0
        %1157 = vmatpush.msra.mxu0 0.0
        %1158 = vmatpush.msra.mxu0 0.0
        %1159 = vmatpush.msra.mxu0 0.0
        %1160 = vmatpush.msra.mxu0 0.0
        %1161 = vmatpush.msra.mxu0 0.0
        %1162 = vmatpush.msra.mxu0 0.0
        %1163 = vmatpush.msra.mxu0 0.0
        %1164 = vmatpush.msra.mxu0 0.0
        %1165 = vmatpush.msra.mxu0 0.0
        %1166 = vmatpush.msra.mxu0 0.0
        %1167 = vmatpush.msra.mxu0 0.0
        %1168 = vmatpush.msra.mxu0 0.0
        %1169 = vmatpush.msra.mxu0 %v1123
        %1170 = vmatmul.f32.gmra.mxu0 %v1108
        %v1171 = vpop.f32.mrf.mxu0
        %v1172 = vadd.f32 %v1090, %v1171
        %1173 = vmatmul.f32.gmra.mxu0 %v1111
        %v1174 = vpop.f32.mrf.mxu0
        %v1175 = vadd.f32 %v1095, %v1174
        %1176 = vmatmul.f32.gmra.mxu0 %v1114
        %v1177 = vpop.f32.mrf.mxu0
        %v1178 = vadd.f32 %v1100, %v1177
        %1179 = vmatmul.f32.gmra.mxu0 %v1117
        %v1180 = vpop.f32.mrf.mxu0
        %v1181 = vadd.f32 %v1105, %v1180
        %1182 = vdwg.mxu0
        %1184 = vset.pattern.permute.xlu0 0
        %1185 = vperm.xlu0 %1184, %v571
        %v1186 = vpop.permute.xlu0 %1185
        %1189 = vset.pattern.permute.xlu0 0
        %1190 = vperm.xlu0 %1189, %v574
        %v1191 = vpop.permute.xlu0 %1190
        %1194 = vset.pattern.permute.xlu0 0
        %1195 = vperm.xlu0 %1194, %v577
        %v1196 = vpop.permute.xlu0 %1195
        %1199 = vset.pattern.permute.xlu0 0
        %1200 = vperm.xlu0 %1199, %v580
        %v1201 = vpop.permute.xlu0 %1200
        %v1203 = vmul.f32 %v1186, %v1143
        %v1204 = vmul.f32 %v1186, %v1172
        %v1205 = vmul.f32 %v1191, %v1146
        %v1206 = vmul.f32 %v1191, %v1175
        %v1207 = vmul.f32 %v1196, %v1149
        %v1208 = vmul.f32 %v1196, %v1178
        %v1209 = vmul.f32 %v1201, %v1152
        %v1210 = vmul.f32 %v1201, %v1181
        %v1211 = vxor.u32 %v1203, 2147483648
        %v1212 = vxor.u32 %v1204, 2147483648
        %v1213 = vxor.u32 %v1205, 2147483648
        %v1214 = vxor.u32 %v1206, 2147483648
        %v1215 = vxor.u32 %v1207, 2147483648
        %v1216 = vxor.u32 %v1208, 2147483648
        %v1217 = vxor.u32 %v1209, 2147483648
        %v1218 = vxor.u32 %v1210, 2147483648
        %v1219 = vmul.f32 %v1211, 1.442695
        %v1220 = vpow.pop %v1219
        %v1221 = vmul.f32 %v1212, 1.442695
        %v1222 = vpow.pop %v1221
        %v1223 = vmul.f32 %v1213, 1.442695
        %v1224 = vpow.pop %v1223
        %v1225 = vmul.f32 %v1214, 1.442695
        %v1226 = vpow.pop %v1225
        %v1227 = vmul.f32 %v1215, 1.442695
        %v1228 = vpow.pop %v1227
        %v1229 = vmul.f32 %v1216, 1.442695
        %v1230 = vpow.pop %v1229
        %v1231 = vmul.f32 %v1217, 1.442695
        %v1232 = vpow.pop %v1231
        %v1233 = vmul.f32 %v1218, 1.442695
        %v1234 = vpow.pop %v1233
        %v1235 = vadd.f32 %v1220, 1.0
        %v1236 = vadd.f32 %v1222, 1.0
        %v1237 = vadd.f32 %v1224, 1.0
        %v1238 = vadd.f32 %v1226, 1.0
        %v1239 = vadd.f32 %v1228, 1.0
        %v1240 = vadd.f32 %v1230, 1.0
        %v1241 = vadd.f32 %v1232, 1.0
        %v1242 = vadd.f32 %v1234, 1.0
        %v1243 = vrcp.pop %v1235
        %v1244 = vmul.f32 %v1235, %v1243
        %v1245 = vsub.f32 1.0, %v1244
        %v1246 = vmul.f32 %v1243, %v1245
        %v1247 = vadd.f32 %v1243, %v1246
        %vm1248 = vweird.f32 %v1235
        %vm1249 = vweird.f32 %v1243
        %vm1250 = vmor %vm1248, %vm1249
        %v1251 = vsel %vm1250, %v1243, %v1247
        %v1252 = vand.u32 2147483647, %v1235
        %vm1253 = vcmp.eq.f32.partialorder %v1252, 8.507059e+37
        %v1254 = vand.u32 %v1235, 2147483648
        %v1255 = vor.u32 1.1754944e-38, %v1254
        %v1256 = vsel %vm1253, %v1255, %v1251
        %v1257 = vmul.f32 1.0, %v1256
        %v1258 = vrcp.pop %v1236
        %v1259 = vmul.f32 %v1236, %v1258
        %v1260 = vsub.f32 1.0, %v1259
        %v1261 = vmul.f32 %v1258, %v1260
        %v1262 = vadd.f32 %v1258, %v1261
        %vm1263 = vweird.f32 %v1236
        %vm1264 = vweird.f32 %v1258
        %vm1265 = vmor %vm1263, %vm1264
        %v1266 = vsel %vm1265, %v1258, %v1262
        %v1267 = vand.u32 2147483647, %v1236
        %vm1268 = vcmp.eq.f32.partialorder %v1267, 8.507059e+37
        %v1269 = vand.u32 %v1236, 2147483648
        %v1270 = vor.u32 1.1754944e-38, %v1269
        %v1271 = vsel %vm1268, %v1270, %v1266
        %v1272 = vmul.f32 1.0, %v1271
        %v1273 = vrcp.pop %v1237
        %v1274 = vmul.f32 %v1237, %v1273
        %v1275 = vsub.f32 1.0, %v1274
        %v1276 = vmul.f32 %v1273, %v1275
        %v1277 = vadd.f32 %v1273, %v1276
        %vm1278 = vweird.f32 %v1237
        %vm1279 = vweird.f32 %v1273
        %vm1280 = vmor %vm1278, %vm1279
        %v1281 = vsel %vm1280, %v1273, %v1277
        %v1282 = vand.u32 2147483647, %v1237
        %vm1283 = vcmp.eq.f32.partialorder %v1282, 8.507059e+37
        %v1284 = vand.u32 %v1237, 2147483648
        %v1285 = vor.u32 1.1754944e-38, %v1284
        %v1286 = vsel %vm1283, %v1285, %v1281
        %v1287 = vmul.f32 1.0, %v1286
        %v1288 = vrcp.pop %v1238
        %v1289 = vmul.f32 %v1238, %v1288
        %v1290 = vsub.f32 1.0, %v1289
        %v1291 = vmul.f32 %v1288, %v1290
        %v1292 = vadd.f32 %v1288, %v1291
        %vm1293 = vweird.f32 %v1238
        %vm1294 = vweird.f32 %v1288
        %vm1295 = vmor %vm1293, %vm1294
        %v1296 = vsel %vm1295, %v1288, %v1292
        %v1297 = vand.u32 2147483647, %v1238
        %vm1298 = vcmp.eq.f32.partialorder %v1297, 8.507059e+37
        %v1299 = vand.u32 %v1238, 2147483648
        %v1300 = vor.u32 1.1754944e-38, %v1299
        %v1301 = vsel %vm1298, %v1300, %v1296
        %v1302 = vmul.f32 1.0, %v1301
        %v1303 = vrcp.pop %v1239
        %v1304 = vmul.f32 %v1239, %v1303
        %v1305 = vsub.f32 1.0, %v1304
        %v1306 = vmul.f32 %v1303, %v1305
        %v1307 = vadd.f32 %v1303, %v1306
        %vm1308 = vweird.f32 %v1239
        %vm1309 = vweird.f32 %v1303
        %vm1310 = vmor %vm1308, %vm1309
        %v1311 = vsel %vm1310, %v1303, %v1307
        %v1312 = vand.u32 2147483647, %v1239
        %vm1313 = vcmp.eq.f32.partialorder %v1312, 8.507059e+37
        %v1314 = vand.u32 %v1239, 2147483648
        %v1315 = vor.u32 1.1754944e-38, %v1314
        %v1316 = vsel %vm1313, %v1315, %v1311
        %v1317 = vmul.f32 1.0, %v1316
        %v1318 = vrcp.pop %v1240
        %v1319 = vmul.f32 %v1240, %v1318
        %v1320 = vsub.f32 1.0, %v1319
        %v1321 = vmul.f32 %v1318, %v1320
        %v1322 = vadd.f32 %v1318, %v1321
        %vm1323 = vweird.f32 %v1240
        %vm1324 = vweird.f32 %v1318
        %vm1325 = vmor %vm1323, %vm1324
        %v1326 = vsel %vm1325, %v1318, %v1322
        %v1327 = vand.u32 2147483647, %v1240
        %vm1328 = vcmp.eq.f32.partialorder %v1327, 8.507059e+37
        %v1329 = vand.u32 %v1240, 2147483648
        %v1330 = vor.u32 1.1754944e-38, %v1329
        %v1331 = vsel %vm1328, %v1330, %v1326
        %v1332 = vmul.f32 1.0, %v1331
        %v1333 = vrcp.pop %v1241
        %v1334 = vmul.f32 %v1241, %v1333
        %v1335 = vsub.f32 1.0, %v1334
        %v1336 = vmul.f32 %v1333, %v1335
        %v1337 = vadd.f32 %v1333, %v1336
        %vm1338 = vweird.f32 %v1241
        %vm1339 = vweird.f32 %v1333
        %vm1340 = vmor %vm1338, %vm1339
        %v1341 = vsel %vm1340, %v1333, %v1337
        %v1342 = vand.u32 2147483647, %v1241
        %vm1343 = vcmp.eq.f32.partialorder %v1342, 8.507059e+37
        %v1344 = vand.u32 %v1241, 2147483648
        %v1345 = vor.u32 1.1754944e-38, %v1344
        %v1346 = vsel %vm1343, %v1345, %v1341
        %v1347 = vmul.f32 1.0, %v1346
        %v1348 = vrcp.pop %v1242
        %v1349 = vmul.f32 %v1242, %v1348
        %v1350 = vsub.f32 1.0, %v1349
        %v1351 = vmul.f32 %v1348, %v1350
        %v1352 = vadd.f32 %v1348, %v1351
        %vm1353 = vweird.f32 %v1242
        %vm1354 = vweird.f32 %v1348
        %vm1355 = vmor %vm1353, %vm1354
        %v1356 = vsel %vm1355, %v1348, %v1352
        %v1357 = vand.u32 2147483647, %v1242
        %vm1358 = vcmp.eq.f32.partialorder %v1357, 8.507059e+37
        %v1359 = vand.u32 %v1242, 2147483648
        %v1360 = vor.u32 1.1754944e-38, %v1359
        %v1361 = vsel %vm1358, %v1360, %v1356
        %v1362 = vmul.f32 1.0, %v1361
        %v1363 = vadd.f32 %v1257, 1.0
        %v1364 = vadd.f32 %v1272, 1.0
        %v1365 = vadd.f32 %v1287, 1.0
        %v1366 = vadd.f32 %v1302, 1.0
        %v1367 = vadd.f32 %v1317, 1.0
        %v1368 = vadd.f32 %v1332, 1.0
        %v1369 = vadd.f32 %v1347, 1.0
        %v1370 = vadd.f32 %v1362, 1.0
        %v1371 = vmul.f32 %v1363, %v475
        %v1372 = vmul.f32 %v1364, %v476
        %v1373 = vmul.f32 %v1365, %v477
        %v1374 = vmul.f32 %v1366, %v478
        %v1375 = vmul.f32 %v1367, %v479
        %v1376 = vmul.f32 %v1368, %v480
        %v1377 = vmul.f32 %v1369, %v481
        %v1378 = vmul.f32 %v1370, %v482
        %1379 = vst [vmem:[%s352] sm:$0xff] %v1371
        %1380 = vst [vmem:[%s352 + $0x8] sm:$0xff] %v1372
        %1381 = vst [vmem:[%s352 + $0x10] sm:$0xff] %v1373
        %1382 = vst [vmem:[%s352 + $0x18] sm:$0xff] %v1374
        %1383 = vst [vmem:[%s352 + $0x20] sm:$0xff] %v1375
        %1384 = vst [vmem:[%s352 + $0x28] sm:$0xff] %v1376
        %1385 = vst [vmem:[%s352 + $0x30] sm:$0xff] %v1377
        %1386 = vst [vmem:[%s352 + $0x38] sm:$0xff] %v1378
        %s1387 = sand.u32 %s228, 1
        %s1388 = scalar_lea.sflag [#allocation5], %s1387
        %s1389 = sand.u32 %s228, 1
        %s1390 = smul.addr %s1389, 64
        %s1391 = scalar_lea.vmem [#allocation6], %s1390
        // Predicated region
        $region61: #{tpu_custom_call.1} parent=55 // pred_check
          %p1392 = pneg %p238
        $region62: #{tpu_custom_call.1} parent=55 // pred_check_branch
          %1394 = sbr.rel (%p1392) target = $region64
        $region63: #{tpu_custom_call.1} parent=55 // pred_region
          %1396 = vsyncadd %s1388, 0
          %s1397 = smul.addr %s26, 8
          %s1398 = smul.addr %s1397, 8
          %s1399 = scalar_lea.hbm %s9, %s1398
          %s1400 = sshll.u32 %s1391, 4
          %s1401 = int_to_ptr.vmem [resolvable:$true] %s1400
          %s1402 = sshll.u32 %s1399, 4
          %s1403 = int_to_ptr.hbm [resolvable:$true] %s1402
          %1408 = dma.vmem_to_hbm [thread:$0]  %s1401, 1024, %s1403, %s1388, 256, 256, 16
        $region64: #{tpu_custom_call.1} parent=55 // pred_fallthru
          _
      $region56: #{tpu_custom_call.1} parent=5 // pred_fallthru
        _
      %p1409 = scmp.le.s32.totalorder 2, %s21
      // Predicated region
      $region65: #{tpu_custom_call.1} parent=5 // pred_check
        %p1410 = pneg %p1409
      $region66: #{tpu_custom_call.1} parent=5 // pred_check_branch
        %1412 = sbr.rel (%p1410) target = $region68
      $region67: #{tpu_custom_call.1} parent=5 // pred_region
        %s1413 = ssub.s32 %s21, 2
        // Predicated region
        $region69: #{tpu_custom_call.1} parent=67 // pred_check
          %p1414 = pneg %p244
        $region70: #{tpu_custom_call.1} parent=67 // pred_check_branch
          %1416 = sbr.rel (%p1414) target = $region72
        $region71: #{tpu_custom_call.1} parent=67 // pred_region
          %s1417 = sand.u32 %s229, 1
          %s1418 = scalar_lea.sflag [#allocation5], %s1417
          %s1419 = sand.u32 %s229, 1
          %s1420 = smul.addr %s1419, 64
          %s1421 = scalar_lea.vmem [#allocation6], %s1420
          %1423 = dma.done %s1418, 1024
        $region72: #{tpu_custom_call.1} parent=67 // pred_fallthru
          _
      $region68: #{tpu_custom_call.1} parent=5 // pred_fallthru
        _
    $region6: #{tpu_custom_call.1} parent=1 // loop_footer
      %s25 = sadd.s32 1, %s21
    $region7: #{tpu_custom_call.1} parent=1 // loop_footer_branch
      %20 = sbr.rel target = $region3
    $region8: #{tpu_custom_call.1} parent=1 // loop_exit
      _
    %1424 = vsyncpa [#allocation4], 1
    %s1425 = scalar_lea.sflag [#allocation4], 1
    %1426 = vsyncpa %s1425, 1
    %1427 = vsyncpa [#allocation5], 1
    %s1428 = scalar_lea.sflag [#allocation5], 1
    %1429 = vsyncpa %s1428, 1

</llo_original>
